<compile_context>
chip_gen: v7x
topology: tpu7x:2x2x1
jax: 0.10.0
libtpu: 0.0.40
codegen_flags: <defaults>
</compile_context>

<pallas_src>
import functools
import math

import jax
import jax.numpy as jnp
from jax.experimental import pallas as pl
from jax.experimental.pallas import tpu as pltpu


# ---------------------------------------------------------------------------
# Kernel
# ---------------------------------------------------------------------------
def _bert_layer_kernel(
    x_ref,        # (1, S, H)  hidden_states (full sequence; resident across q blocks)
    mask_ref,     # (1, 1, S)  additive attention mask row (broadcast over heads/queries)
    wq_ref, bq_ref, wk_ref, bk_ref, wv_ref, bv_ref,   # attention projections (in,out) bf16
    wo_ref, bo_ref, g1_ref, b1_ref,                   # attention output dense + LN1
    wi_ref, bi_ref,                                   # intermediate dense (H -> I)
    wo2_ref, bo2_ref, g2_ref, b2_ref,                 # output dense (I -> H) + LN2
    out_ref,      # (1, BQ, H)
    k_scr, v_scr,  # (NH, S, dh) bf16 scratch: K/V computed once per batch element
    *, num_heads, head_dim, block_q, ln_eps,
):
    f32 = jnp.float32
    bf16 = jnp.bfloat16
    seq = x_ref.shape[1]
    hidden = num_heads * head_dim

    # ---- K / V projections: once per batch element (q block 0), reused after.
    @pl.when(pl.program_id(1) == 0)
    def _():
        xf = x_ref[0].astype(bf16)                                          # (S, H)
        k = jnp.dot(xf, wk_ref[...], preferred_element_type=f32) + bk_ref[...]
        v = jnp.dot(xf, wv_ref[...], preferred_element_type=f32) + bv_ref[...]
        # Cast to bf16 BEFORE the head-split relayout (halves transpose bytes).
        k_scr[...] = k.astype(bf16).reshape(seq, num_heads, head_dim).transpose(1, 0, 2)
        v_scr[...] = v.astype(bf16).reshape(seq, num_heads, head_dim).transpose(1, 0, 2)

    q_start = pl.multiple_of(pl.program_id(1) * block_q, block_q)
    x_q = x_ref[0, pl.ds(q_start, block_q), :].astype(f32)                  # (BQ, H) residual

    # ---- Q projection (1/sqrt(dh) already folded into Wq/bq at prepare time).
    qp = jnp.dot(x_q.astype(bf16), wq_ref[...], preferred_element_type=f32) + bq_ref[...]
    q3 = qp.astype(bf16).reshape(block_q, num_heads, head_dim).transpose(1, 0, 2)  # (NH,BQ,dh)

    # ---- Attention scores for all heads at once (no per-head slices, no k.T).
    scores = jnp.einsum("nqd,nkd->nqk", q3, k_scr[...],
                        preferred_element_type=f32)                         # (NH, BQ, S)
    scores = scores + mask_ref[0]                                           # (1, S) broadcast

    # ---- Softmax (f32). Normalization is deferred to the (NH,BQ,dh) context,
    #      which is ~S/dh times fewer elements than normalizing P itself.
    #      (attention-probs dropout is identity in eval mode.)
    m = jnp.max(scores, axis=-1, keepdims=True)
    p = jnp.exp(scores - m)
    denom = jnp.sum(p, axis=-1, keepdims=True)

    # ---- (unnormalized) P @ V for all heads, scale rows, then merge heads.
    ctx = jnp.einsum("nqk,nkd->nqd", p.astype(bf16), v_scr[...],
                     preferred_element_type=f32)                            # (NH, BQ, dh)
    ctx = ctx * pl.reciprocal(denom, approx=True)
    ctx = ctx.astype(bf16).transpose(1, 0, 2).reshape(block_q, hidden)      # (BQ, H) bf16

    def layer_norm(t, gamma, beta):
        mu = jnp.mean(t, axis=-1, keepdims=True)
        var = jnp.mean(jnp.square(t - mu), axis=-1, keepdims=True)
        return (t - mu) * jax.lax.rsqrt(var + ln_eps) * gamma + beta

    # ---- Attention output dense + residual + LayerNorm (dropout = identity).
    att = jnp.dot(ctx, wo_ref[...], preferred_element_type=f32) + bo_ref[...]
    att = layer_norm(att + x_q, g1_ref[...], b1_ref[...])                   # (BQ, H) f32

    # ---- Intermediate dense + tanh-approx GELU (tanh -> EUP slot; ~1e-3 max
    #      deviation from the exact-erf GELU of the reference module).
    inter = jnp.dot(att.astype(bf16), wi_ref[...], preferred_element_type=f32) + bi_ref[...]
    c = math.sqrt(2.0 / math.pi)
    inter = 0.5 * inter * (1.0 + jnp.tanh(c * (inter + 0.044715 * inter * inter * inter)))

    # ---- Output dense + residual + LayerNorm (dropout = identity).
    out = jnp.dot(inter.astype(bf16), wo2_ref[...], preferred_element_type=f32) + bo2_ref[...]
    out = layer_norm(out + att, g2_ref[...], b2_ref[...])
    out_ref[0] = out.astype(out_ref.dtype)


# ---------------------------------------------------------------------------
# Host-side helpers
# ---------------------------------------------------------------------------
def _vmem_capacity_bytes():
    try:
        info = pltpu.get_tpu_info()
        cap = getattr(info, "vmem_capacity_bytes", None)
        if cap:
            return int(cap)
    except Exception:
        pass
    return 128 * 1024 * 1024


def _pick_block_q(seq, hidden, inter, num_heads, budget_bytes):
    """Largest q block whose working set fits the VMEM budget (generation-aware)."""
    head_dim = hidden // num_heads
    weights = (4 * hidden * hidden + 2 * hidden * inter) * 2        # bf16, single-buffered
    weights += (6 * hidden + inter) * 4                             # f32 bias / LN rows
    resident = seq * hidden * 4 * 2                                 # x block (f32, 2-buf)
    resident += 2 * num_heads * seq * head_dim * 2                  # K/V bf16 scratch
    resident += seq * 4 * 2                                         # mask row (2-buf)
    smallest = None
    for bq in (512, 256, 128, 64, 32, 16, 8):
        if seq % bq:
            continue
        smallest = bq
        scores = num_heads * bq * seq * 4 * 2.5                     # scores + exp + slack
        act = bq * inter * 4 * 2 + bq * hidden * 4 * 6              # FFN / attention tiles
        out = bq * hidden * 4 * 2                                   # output block (2-buf)
        if weights + resident + scores + act + out <= budget_bytes:
            return bq
    return smallest if smallest is not None else seq


def prepare_bert_layer_params(params, *, num_heads):
    """One-time prep: (out,in)->(in,out) transpose, bf16 cast, fold 1/sqrt(dh) into Wq/bq.

    `params` uses PyTorch Linear layout: weights (out, in), biases (out,).
    Call once and reuse the result for every bert_layer() call.
    """
    H = params["wq"].shape[1]
    head_dim = H // num_heads
    scale = 1.0 / math.sqrt(head_dim)
    bf16, f32 = jnp.bfloat16, jnp.float32

    def wt(name, s=1.0):
        w = jnp.asarray(params[name], f32).T
        if s != 1.0:
            w = w * s
        return w.astype(bf16)

    def row(name, s=1.0):
        r = jnp.asarray(params[name], f32)
        if s != 1.0:
            r = r * s
        return r[None, :]

    return dict(
        wq=wt("wq", scale), bq=row("bq", scale),
        wk=wt("wk"), bk=row("bk"),
        wv=wt("wv"), bv=row("bv"),
        wo=wt("wo"), bo=row("bo"),
        ln1_gamma=row("ln1_gamma"), ln1_beta=row("ln1_beta"),
        wi=wt("wi"), bi=row("bi"),
        wo2=wt("wo2"), bo2=row("bo2"),
        ln2_gamma=row("ln2_gamma"), ln2_beta=row("ln2_beta"),
    )


def bert_layer(hidden_states, prepared, attention_mask=None, *, num_heads, ln_eps=1e-12):
    """hidden_states: (B, S, H); `prepared` from prepare_bert_layer_params().
    attention_mask: None or additive mask broadcastable to (B, 1, 1, S) (standard
    BERT extended padding mask). Returns (B, S, H)."""
    B, S, H = hidden_states.shape
    inter_size = prepared["wi"].shape[1]          # prepared layout: (in, out)
    head_dim = H // num_heads

    # VMEM budget: ~100 MiB on 128-MiB parts (v5e/v6e), ~56 MiB on v7x (64 MiB).
    vmem_cap = _vmem_capacity_bytes()
    vmem_limit = int(min(vmem_cap * 7 // 8, 100 * 1024 * 1024))
    block_q = _pick_block_q(S, H, inter_size, num_heads, int(vmem_limit * 0.8))
    n_q = S // block_q

    # Mask: single (B, 1, S) additive row, broadcast over heads/queries in-kernel.
    # NOTE: only standard padding masks are supported; a true per-head/per-query
    # (B, NH, Sq, Sk) mask will fail the broadcast below.
    if attention_mask is None:
        mask = jnp.zeros((B, 1, S), jnp.float32)
    else:
        m = jnp.asarray(attention_mask, jnp.float32)
        if m.ndim == 4:
            m = jnp.broadcast_to(m, (B, 1, 1, S))
        mask = m.reshape(B, 1, S)

    operands = (
        hidden_states, mask,
        prepared["wq"], prepared["bq"], prepared["wk"], prepared["bk"],
        prepared["wv"], prepared["bv"],
        prepared["wo"], prepared["bo"], prepared["ln1_gamma"], prepared["ln1_beta"],
        prepared["wi"], prepared["bi"],
        prepared["wo2"], prepared["bo2"], prepared["ln2_gamma"], prepared["ln2_beta"],
    )

    def const(shape):
        # Grid-constant block (index_map always (0,...)): single-buffer it so the
        # resident weights don't pay 2x VMEM for pointless double-buffering.
        return pl.BlockSpec(shape, lambda bb, qq: (0,) * len(shape),
                            pipeline_mode=pl.Buffered(1))

    in_specs = [
        pl.BlockSpec((1, S, H), lambda bb, qq: (bb, 0, 0)),   # hidden_states (resident over q)
        pl.BlockSpec((1, 1, S), lambda bb, qq: (bb, 0, 0)),   # mask row
        const((H, H)), const((1, H)),                         # Wq, bq (pre-scaled)
        const((H, H)), const((1, H)),                         # Wk, bk
        const((H, H)), const((1, H)),                         # Wv, bv
        const((H, H)), const((1, H)),                         # Wo, bo
        const((1, H)), const((1, H)),                         # LN1 gamma, beta
        const((H, inter_size)), const((1, inter_size)),       # Wi, bi
        const((inter_size, H)), const((1, H)),                # Wo2, bo2
        const((1, H)), const((1, H)),                         # LN2 gamma, beta
    ]

    kernel = functools.partial(
        _bert_layer_kernel,
        num_heads=num_heads, head_dim=head_dim, block_q=block_q, ln_eps=ln_eps,
    )

    return pl.pallas_call(
        kernel,
        out_shape=jax.ShapeDtypeStruct((B, S, H), hidden_states.dtype),
        grid_spec=pltpu.PrefetchScalarGridSpec(
            num_scalar_prefetch=0,
            grid=(B, n_q),
            in_specs=in_specs,
            out_specs=pl.BlockSpec((1, block_q, H), lambda bb, qq: (bb, qq, 0)),
            scratch_shapes=[
                pltpu.VMEM((num_heads, S, head_dim), jnp.bfloat16),   # K (head-major)
                pltpu.VMEM((num_heads, S, head_dim), jnp.bfloat16),   # V (head-major)
            ],
        ),
        # K/V scratch carries across the q axis -> "arbitrary"; batch is "parallel".
        compiler_params=pltpu.CompilerParams(
            dimension_semantics=("parallel", "arbitrary"),
            vmem_limit_bytes=vmem_limit),
    )(*operands)


# ---------------------------------------------------------------------------
# Pure-JAX reference (mirrors the PyTorch BertLayer forward, eval mode, f32)
# ---------------------------------------------------------------------------
def _reference(x, params, mask4, num_heads, ln_eps=1e-12):
    B, S, H = x.shape
    dh = H // num_heads

    def lin(t, w, b):  # PyTorch Linear: x @ W.T + b, W is (out, in)
        return t @ w.T + b

    def ln(t, g, b):
        mu = t.mean(-1, keepdims=True)
        var = ((t - mu) ** 2).mean(-1, keepdims=True)
        return (t - mu) / jnp.sqrt(var + ln_eps) * g + b

    q = lin(x, params["wq"], params["bq"]).reshape(B, S, num_heads, dh).transpose(0, 2, 1, 3)
    k = lin(x, params["wk"], params["bk"]).reshape(B, S, num_heads, dh).transpose(0, 2, 1, 3)
    v = lin(x, params["wv"], params["bv"]).reshape(B, S, num_heads, dh).transpose(0, 2, 1, 3)
    s = jnp.einsum("bhqd,bhkd->bhqk", q, k) / math.sqrt(dh)
    if mask4 is not None:
        s = s + mask4
    p = jax.nn.softmax(s, axis=-1)
    ctx = jnp.einsum("bhqk,bhkd->bhqd", p, v).transpose(0, 2, 1, 3).reshape(B, S, H)

    att = ln(lin(ctx, params["wo"], params["bo"]) + x, params["ln1_gamma"], params["ln1_beta"])
    inter = lin(att, params["wi"], params["bi"])
    inter = inter * 0.5 * (1.0 + jax.lax.erf(inter / math.sqrt(2.0)))   # exact-erf gelu
    out = ln(lin(inter, params["wo2"], params["bo2"]) + att,
             params["ln2_gamma"], params["ln2_beta"])
    return out


if __name__ == "__main__":
    # Small config: hidden=32, heads=4 (head_dim=8), intermediate=128, batch=2, seq=8.
    B, S, H, NH = 2, 8, 32, 4
    I = 4 * H

    key = jax.random.PRNGKey(0)
    ks = jax.random.split(key, 16)

    def lin_w(k, out_d, in_d):
        return 0.05 * jax.random.normal(k, (out_d, in_d), jnp.float32)   # PyTorch (out, in)

    params = {
        "wq": lin_w(ks[0], H, H), "bq": 0.05 * jax.random.normal(ks[1], (H,), jnp.float32),
        "wk": lin_w(ks[2], H, H), "bk": 0.05 * jax.random.normal(ks[3], (H,), jnp.float32),
        "wv": lin_w(ks[4], H, H), "bv": 0.05 * jax.random.normal(ks[5], (H,), jnp.float32),
        "wo": lin_w(ks[6], H, H), "bo": 0.05 * jax.random.normal(ks[7], (H,), jnp.float32),
        "ln1_gamma": jnp.ones((H,), jnp.float32), "ln1_beta": jnp.zeros((H,), jnp.float32),
        "wi": lin_w(ks[8], I, H), "bi": 0.05 * jax.random.normal(ks[9], (I,), jnp.float32),
        "wo2": lin_w(ks[10], H, I), "bo2": 0.05 * jax.random.normal(ks[11], (H,), jnp.float32),
        "ln2_gamma": jnp.ones((H,), jnp.float32), "ln2_beta": jnp.zeros((H,), jnp.float32),
    }

    x = jax.random.normal(ks[12], (B, S, H), jnp.float32)
    # BERT-style extended additive mask: (B, 1, 1, S), 0 = keep, -10000 = masked.
    keep = (jax.random.uniform(ks[13], (B, 1, 1, S)) > 0.2).astype(jnp.float32)
    attention_mask = (1.0 - keep) * -10000.0

    # One-time weight prep (transpose/cast/scale-fold) outside the per-call path.
    prepared = prepare_bert_layer_params(params, num_heads=NH)

    out = bert_layer(x, prepared, attention_mask, num_heads=NH)
    out = jax.block_until_ready(out)

    ref = _reference(x, params, attention_mask, NH)
    assert out.shape == (B, S, H)
    err = float(jnp.max(jnp.abs(out - ref)))
    # bf16 MXU operands + tanh-approx gelu + approx reciprocal vs f32/erf reference.
    assert err < 3e-2, f"max abs err {err}"

    print("KERNEL_OK")
</pallas_src>

<mosaic_0001>
module attributes {stable_mosaic.version = 11 : i64} {
  func.func @_bert_layer_kernel(%arg0: i32, %arg1: i32, %arg2: memref<1x8x32xf32, #tpu.memory_space<vmem>>, %arg3: memref<1x1x8xf32, #tpu.memory_space<vmem>>, %arg4: memref<32x32xbf16, #tpu.memory_space<vmem>>, %arg5: memref<1x32xf32, #tpu.memory_space<vmem>>, %arg6: memref<32x32xbf16, #tpu.memory_space<vmem>>, %arg7: memref<1x32xf32, #tpu.memory_space<vmem>>, %arg8: memref<32x32xbf16, #tpu.memory_space<vmem>>, %arg9: memref<1x32xf32, #tpu.memory_space<vmem>>, %arg10: memref<32x32xbf16, #tpu.memory_space<vmem>>, %arg11: memref<1x32xf32, #tpu.memory_space<vmem>>, %arg12: memref<1x32xf32, #tpu.memory_space<vmem>>, %arg13: memref<1x32xf32, #tpu.memory_space<vmem>>, %arg14: memref<32x128xbf16, #tpu.memory_space<vmem>>, %arg15: memref<1x128xf32, #tpu.memory_space<vmem>>, %arg16: memref<128x32xbf16, #tpu.memory_space<vmem>>, %arg17: memref<1x32xf32, #tpu.memory_space<vmem>>, %arg18: memref<1x32xf32, #tpu.memory_space<vmem>>, %arg19: memref<1x32xf32, #tpu.memory_space<vmem>>, %arg20: memref<1x8x32xf32, #tpu.memory_space<vmem>>, %arg21: memref<4x8x8xbf16, #tpu.memory_space<vmem>>, %arg22: memref<4x8x8xbf16, #tpu.memory_space<vmem>>) attributes {dimension_semantics = [#tpu.dimension_semantics<parallel>, #tpu.dimension_semantics<arbitrary>], iteration_bounds = array<i64: 2, 1>, scalar_prefetch = 0 : i64, scratch_operands = 2 : i64, tpu.core_type = #tpu.core_type<tc>, window_params = [{transform_indices = @transform_0, window_bounds = array<i64: 1, 8, 32>}, {transform_indices = @transform_1, window_bounds = array<i64: 1, 1, 8>}, {pipeline_mode = #tpu.pipeline_mode<synchronous>, transform_indices = @transform_2, window_bounds = array<i64: 32, 32>}, {pipeline_mode = #tpu.pipeline_mode<synchronous>, transform_indices = @transform_3, window_bounds = array<i64: 1, 32>}, {pipeline_mode = #tpu.pipeline_mode<synchronous>, transform_indices = @transform_4, window_bounds = array<i64: 32, 32>}, {pipeline_mode = #tpu.pipeline_mode<synchronous>, transform_indices = @transform_5, window_bounds = array<i64: 1, 32>}, {pipeline_mode = #tpu.pipeline_mode<synchronous>, transform_indices = @transform_6, window_bounds = array<i64: 32, 32>}, {pipeline_mode = #tpu.pipeline_mode<synchronous>, transform_indices = @transform_7, window_bounds = array<i64: 1, 32>}, {pipeline_mode = #tpu.pipeline_mode<synchronous>, transform_indices = @transform_8, window_bounds = array<i64: 32, 32>}, {pipeline_mode = #tpu.pipeline_mode<synchronous>, transform_indices = @transform_9, window_bounds = array<i64: 1, 32>}, {pipeline_mode = #tpu.pipeline_mode<synchronous>, transform_indices = @transform_10, window_bounds = array<i64: 1, 32>}, {pipeline_mode = #tpu.pipeline_mode<synchronous>, transform_indices = @transform_11, window_bounds = array<i64: 1, 32>}, {pipeline_mode = #tpu.pipeline_mode<synchronous>, transform_indices = @transform_12, window_bounds = array<i64: 32, 128>}, {pipeline_mode = #tpu.pipeline_mode<synchronous>, transform_indices = @transform_13, window_bounds = array<i64: 1, 128>}, {pipeline_mode = #tpu.pipeline_mode<synchronous>, transform_indices = @transform_14, window_bounds = array<i64: 128, 32>}, {pipeline_mode = #tpu.pipeline_mode<synchronous>, transform_indices = @transform_15, window_bounds = array<i64: 1, 32>}, {pipeline_mode = #tpu.pipeline_mode<synchronous>, transform_indices = @transform_16, window_bounds = array<i64: 1, 32>}, {pipeline_mode = #tpu.pipeline_mode<synchronous>, transform_indices = @transform_17, window_bounds = array<i64: 1, 32>}, {transform_indices = @transform_18, window_bounds = array<i64: 1, 8, 32>}]} {
    %c0_i32 = arith.constant 0 : i32
    %0 = arith.cmpi eq, %arg1, %c0_i32 : i32
    %1 = arith.extui %0 : i1 to i32
    %c0_i32_0 = arith.constant 0 : i32
    %2 = arith.cmpi ne, %1, %c0_i32_0 : i32
    scf.if %2 {
      %c0_59 = arith.constant 0 : index
      %c0_60 = arith.constant 0 : index
      %c0_61 = arith.constant 0 : index
      %123 = vector.load %arg2[%c0_59, %c0_60, %c0_61] : memref<1x8x32xf32, #tpu.memory_space<vmem>>, vector<1x8x32xf32>
      %124 = vector.shape_cast %123 : vector<1x8x32xf32> to vector<8x32xf32>
      %125 = arith.truncf %124 : vector<8x32xf32> to vector<8x32xbf16>
      %c0_62 = arith.constant 0 : index
      %c0_63 = arith.constant 0 : index
      %126 = vector.load %arg6[%c0_62, %c0_63] : memref<32x32xbf16, #tpu.memory_space<vmem>>, vector<32x32xbf16>
      %cst_64 = arith.constant dense<0.000000e+00> : vector<8x32xf32>
      %127 = tpu.matmul %125, %126, %cst_64 {dimension_numbers = #tpu.dot_dimension_numbers<[1], [0], [0], [1], [0, 0, 1, 1], [], []>} : vector<8x32xbf16>, vector<32x32xbf16>, vector<8x32xf32> -> vector<8x32xf32>
      %c0_65 = arith.constant 0 : index
      %c0_66 = arith.constant 0 : index
      %128 = vector.load %arg7[%c0_65, %c0_66] : memref<1x32xf32, #tpu.memory_space<vmem>>, vector<1x32xf32>
      %129 = vector.broadcast %128 : vector<1x32xf32> to vector<8x32xf32>
      %130 = arith.addf %127, %129 : vector<8x32xf32>
      %c0_67 = arith.constant 0 : index
      %c0_68 = arith.constant 0 : index
      %131 = vector.load %arg8[%c0_67, %c0_68] : memref<32x32xbf16, #tpu.memory_space<vmem>>, vector<32x32xbf16>
      %cst_69 = arith.constant dense<0.000000e+00> : vector<8x32xf32>
      %132 = tpu.matmul %125, %131, %cst_69 {dimension_numbers = #tpu.dot_dimension_numbers<[1], [0], [0], [1], [0, 0, 1, 1], [], []>} : vector<8x32xbf16>, vector<32x32xbf16>, vector<8x32xf32> -> vector<8x32xf32>
      %c0_70 = arith.constant 0 : index
      %c0_71 = arith.constant 0 : index
      %133 = vector.load %arg9[%c0_70, %c0_71] : memref<1x32xf32, #tpu.memory_space<vmem>>, vector<1x32xf32>
      %134 = vector.broadcast %133 : vector<1x32xf32> to vector<8x32xf32>
      %135 = arith.addf %132, %134 : vector<8x32xf32>
      %136 = arith.truncf %130 : vector<8x32xf32> to vector<8x32xbf16>
      %137 = vector.shape_cast %136 : vector<8x32xbf16> to vector<8x4x8xbf16>
      %138 = tpu.transpose %137, [1, 0, 2] : vector<8x4x8xbf16> -> vector<4x8x8xbf16>
      %c0_72 = arith.constant 0 : index
      %c0_73 = arith.constant 0 : index
      %c0_74 = arith.constant 0 : index
      %139 = vector.load %arg21[%c0_72, %c0_73, %c0_74] : memref<4x8x8xbf16, #tpu.memory_space<vmem>>, vector<4x8x8xbf16>
      tpu.vector_store %arg21[%c0_72, %c0_73, %c0_74], %138 {strides = array<i32>} : memref<4x8x8xbf16, #tpu.memory_space<vmem>>, vector<4x8x8xbf16>,
      %140 = arith.truncf %135 : vector<8x32xf32> to vector<8x32xbf16>
      %141 = vector.shape_cast %140 : vector<8x32xbf16> to vector<8x4x8xbf16>
      %142 = tpu.transpose %141, [1, 0, 2] : vector<8x4x8xbf16> -> vector<4x8x8xbf16>
      %c0_75 = arith.constant 0 : index
      %c0_76 = arith.constant 0 : index
      %c0_77 = arith.constant 0 : index
      %143 = vector.load %arg22[%c0_75, %c0_76, %c0_77] : memref<4x8x8xbf16, #tpu.memory_space<vmem>>, vector<4x8x8xbf16>
      tpu.vector_store %arg22[%c0_75, %c0_76, %c0_77], %142 {strides = array<i32>} : memref<4x8x8xbf16, #tpu.memory_space<vmem>>, vector<4x8x8xbf16>,
    } else {
    }
    %c8_i32 = arith.constant 8 : i32
    %3 = arith.muli %arg1, %c8_i32 : i32
    %4 = tpu.assume_multiple %3, 8 : i32
    %c0 = arith.constant 0 : index
    %5 = arith.index_cast %4 : i32 to index
    %c0_1 = arith.constant 0 : index
    %6 = vector.load %arg2[%c0, %5, %c0_1] : memref<1x8x32xf32, #tpu.memory_space<vmem>>, vector<1x8x32xf32>
    %7 = vector.shape_cast %6 : vector<1x8x32xf32> to vector<8x32xf32>
    %8 = arith.truncf %7 : vector<8x32xf32> to vector<8x32xbf16>
    %c0_2 = arith.constant 0 : index
    %c0_3 = arith.constant 0 : index
    %9 = vector.load %arg4[%c0_2, %c0_3] : memref<32x32xbf16, #tpu.memory_space<vmem>>, vector<32x32xbf16>
    %cst = arith.constant dense<0.000000e+00> : vector<8x32xf32>
    %10 = tpu.matmul %8, %9, %cst {dimension_numbers = #tpu.dot_dimension_numbers<[1], [0], [0], [1], [0, 0, 1, 1], [], []>} : vector<8x32xbf16>, vector<32x32xbf16>, vector<8x32xf32> -> vector<8x32xf32>
    %c0_4 = arith.constant 0 : index
    %c0_5 = arith.constant 0 : index
    %11 = vector.load %arg5[%c0_4, %c0_5] : memref<1x32xf32, #tpu.memory_space<vmem>>, vector<1x32xf32>
    %12 = vector.broadcast %11 : vector<1x32xf32> to vector<8x32xf32>
    %13 = arith.addf %10, %12 : vector<8x32xf32>
    %14 = arith.truncf %13 : vector<8x32xf32> to vector<8x32xbf16>
    %15 = vector.shape_cast %14 : vector<8x32xbf16> to vector<8x4x8xbf16>
    %16 = tpu.transpose %15, [1, 0, 2] : vector<8x4x8xbf16> -> vector<4x8x8xbf16>
    %c0_6 = arith.constant 0 : index
    %c0_7 = arith.constant 0 : index
    %c0_8 = arith.constant 0 : index
    %17 = vector.load %arg21[%c0_6, %c0_7, %c0_8] : memref<4x8x8xbf16, #tpu.memory_space<vmem>>, vector<4x8x8xbf16>
    "tpu.trace_start"() <{level = 10 : i32, message = "nqd,nkd->nqk"}> : () -> ()
    %cst_9 = arith.constant dense<0.000000e+00> : vector<4x8x8xf32>
    %18 = tpu.matmul %16, %17, %cst_9 {dimension_numbers = #tpu.dot_dimension_numbers<[2], [2], [1], [1], [0, 0, 0, 1, 1, 1], [0], [0]>} : vector<4x8x8xbf16>, vector<4x8x8xbf16>, vector<4x8x8xf32> -> vector<4x8x8xf32>
    "tpu.trace_stop"() : () -> ()
    %c0_10 = arith.constant 0 : index
    %c0_11 = arith.constant 0 : index
    %c0_12 = arith.constant 0 : index
    %19 = vector.load %arg3[%c0_10, %c0_11, %c0_12] : memref<1x1x8xf32, #tpu.memory_space<vmem>>, vector<1x1x8xf32>
    %20 = vector.shape_cast %19 : vector<1x1x8xf32> to vector<1x8xf32>
    %21 = vector.shape_cast %20 : vector<1x8xf32> to vector<1x1x8xf32>
    %22 = vector.broadcast %21 : vector<1x1x8xf32> to vector<4x8x8xf32>
    %23 = arith.addf %18, %22 : vector<4x8x8xf32>
    %cst_13 = arith.constant dense<0xFF800000> : vector<4x8xf32>
    %24 = vector.multi_reduction <maximumf>, %23, %cst_13 [2] : vector<4x8x8xf32> to vector<4x8xf32>
    %25 = vector.shape_cast %24 : vector<4x8xf32> to vector<4x8x1xf32>
    %26 = vector.broadcast %25 : vector<4x8x1xf32> to vector<4x8x8xf32>
    %27 = arith.subf %23, %26 : vector<4x8x8xf32>
    %28 = math.exp %27 : vector<4x8x8xf32>
    %cst_14 = arith.constant dense<0.000000e+00> : vector<4x8xf32>
    %29 = vector.multi_reduction <add>, %28, %cst_14 [2] : vector<4x8x8xf32> to vector<4x8xf32>
    %30 = vector.shape_cast %29 : vector<4x8xf32> to vector<4x8x1xf32>
    %31 = arith.truncf %28 : vector<4x8x8xf32> to vector<4x8x8xbf16>
    %c0_15 = arith.constant 0 : index
    %c0_16 = arith.constant 0 : index
    %c0_17 = arith.constant 0 : index
    %32 = vector.load %arg22[%c0_15, %c0_16, %c0_17] : memref<4x8x8xbf16, #tpu.memory_space<vmem>>, vector<4x8x8xbf16>
    "tpu.trace_start"() <{level = 10 : i32, message = "nqk,nkd->nqd"}> : () -> ()
    %cst_18 = arith.constant dense<0.000000e+00> : vector<4x8x8xf32>
    %33 = tpu.matmul %31, %32, %cst_18 {dimension_numbers = #tpu.dot_dimension_numbers<[2], [1], [1], [2], [0, 0, 0, 1, 1, 2], [0], [0]>} : vector<4x8x8xbf16>, vector<4x8x8xbf16>, vector<4x8x8xf32> -> vector<4x8x8xf32>
    "tpu.trace_stop"() : () -> ()
    %34 = tpu.reciprocal %30 {approx = true} : vector<4x8x1xf32> -> vector<4x8x1xf32>
    %35 = vector.broadcast %34 : vector<4x8x1xf32> to vector<4x8x8xf32>
    %36 = arith.mulf %33, %35 : vector<4x8x8xf32>
    %37 = arith.truncf %36 : vector<4x8x8xf32> to vector<4x8x8xbf16>
    %38 = tpu.transpose %37, [1, 0, 2] : vector<4x8x8xbf16> -> vector<8x4x8xbf16>
    %39 = vector.shape_cast %38 : vector<8x4x8xbf16> to vector<8x32xbf16>
    %c0_19 = arith.constant 0 : index
    %c0_20 = arith.constant 0 : index
    %40 = vector.load %arg10[%c0_19, %c0_20] : memref<32x32xbf16, #tpu.memory_space<vmem>>, vector<32x32xbf16>
    %cst_21 = arith.constant dense<0.000000e+00> : vector<8x32xf32>
    %41 = tpu.matmul %39, %40, %cst_21 {dimension_numbers = #tpu.dot_dimension_numbers<[1], [0], [0], [1], [0, 0, 1, 1], [], []>} : vector<8x32xbf16>, vector<32x32xbf16>, vector<8x32xf32> -> vector<8x32xf32>
    %c0_22 = arith.constant 0 : index
    %c0_23 = arith.constant 0 : index
    %42 = vector.load %arg11[%c0_22, %c0_23] : memref<1x32xf32, #tpu.memory_space<vmem>>, vector<1x32xf32>
    %43 = vector.broadcast %42 : vector<1x32xf32> to vector<8x32xf32>
    %44 = arith.addf %41, %43 : vector<8x32xf32>
    %45 = arith.addf %44, %7 : vector<8x32xf32>
    %c0_24 = arith.constant 0 : index
    %c0_25 = arith.constant 0 : index
    %46 = vector.load %arg12[%c0_24, %c0_25] : memref<1x32xf32, #tpu.memory_space<vmem>>, vector<1x32xf32>
    %c0_26 = arith.constant 0 : index
    %c0_27 = arith.constant 0 : index
    %47 = vector.load %arg13[%c0_26, %c0_27] : memref<1x32xf32, #tpu.memory_space<vmem>>, vector<1x32xf32>
    %cst_28 = arith.constant dense<0.000000e+00> : vector<8xf32>
    %48 = vector.multi_reduction <add>, %45, %cst_28 [1] : vector<8x32xf32> to vector<8xf32>
    %49 = vector.shape_cast %48 : vector<8xf32> to vector<8x1xf32>
    %cst_29 = arith.constant 3.200000e+01 : f32
    %50 = vector.broadcast %cst_29 : f32 to vector<8x1xf32>
    %51 = arith.divf %49, %50 : vector<8x1xf32>
    %52 = vector.broadcast %51 : vector<8x1xf32> to vector<8x32xf32>
    %53 = arith.subf %45, %52 : vector<8x32xf32>
    %54 = arith.mulf %53, %53 : vector<8x32xf32>
    %cst_30 = arith.constant dense<0.000000e+00> : vector<8xf32>
    %55 = vector.multi_reduction <add>, %54, %cst_30 [1] : vector<8x32xf32> to vector<8xf32>
    %56 = vector.shape_cast %55 : vector<8xf32> to vector<8x1xf32>
    %cst_31 = arith.constant 3.200000e+01 : f32
    %57 = vector.broadcast %cst_31 : f32 to vector<8x1xf32>
    %58 = arith.divf %56, %57 : vector<8x1xf32>
    %59 = vector.broadcast %51 : vector<8x1xf32> to vector<8x32xf32>
    %60 = arith.subf %45, %59 : vector<8x32xf32>
    %cst_32 = arith.constant 9.99999996E-13 : f32
    %61 = vector.broadcast %cst_32 : f32 to vector<8x1xf32>
    %62 = arith.addf %58, %61 : vector<8x1xf32>
    %63 = math.rsqrt %62 : vector<8x1xf32>
    %64 = vector.broadcast %63 : vector<8x1xf32> to vector<8x32xf32>
    %65 = arith.mulf %60, %64 : vector<8x32xf32>
    %66 = vector.broadcast %46 : vector<1x32xf32> to vector<8x32xf32>
    %67 = arith.mulf %65, %66 : vector<8x32xf32>
    %68 = vector.broadcast %47 : vector<1x32xf32> to vector<8x32xf32>
    %69 = arith.addf %67, %68 : vector<8x32xf32>
    %70 = arith.truncf %69 : vector<8x32xf32> to vector<8x32xbf16>
    %c0_33 = arith.constant 0 : index
    %c0_34 = arith.constant 0 : index
    %71 = vector.load %arg14[%c0_33, %c0_34] : memref<32x128xbf16, #tpu.memory_space<vmem>>, vector<32x128xbf16>
    %cst_35 = arith.constant dense<0.000000e+00> : vector<8x128xf32>
    %72 = tpu.matmul %70, %71, %cst_35 {dimension_numbers = #tpu.dot_dimension_numbers<[1], [0], [0], [1], [0, 0, 1, 1], [], []>} : vector<8x32xbf16>, vector<32x128xbf16>, vector<8x128xf32> -> vector<8x128xf32>
    %c0_36 = arith.constant 0 : index
    %c0_37 = arith.constant 0 : index
    %73 = vector.load %arg15[%c0_36, %c0_37] : memref<1x128xf32, #tpu.memory_space<vmem>>, vector<1x128xf32>
    %74 = vector.broadcast %73 : vector<1x128xf32> to vector<8x128xf32>
    %75 = arith.addf %72, %74 : vector<8x128xf32>
    %cst_38 = arith.constant 5.000000e-01 : f32
    %76 = vector.broadcast %cst_38 : f32 to vector<8x128xf32>
    %77 = arith.mulf %76, %75 : vector<8x128xf32>
    %cst_39 = arith.constant 4.471500e-02 : f32
    %78 = vector.broadcast %cst_39 : f32 to vector<8x128xf32>
    %79 = arith.mulf %78, %75 : vector<8x128xf32>
    %80 = arith.mulf %79, %75 : vector<8x128xf32>
    %81 = arith.mulf %80, %75 : vector<8x128xf32>
    %82 = arith.addf %75, %81 : vector<8x128xf32>
    %cst_40 = arith.constant 0.797884583 : f32
    %83 = vector.broadcast %cst_40 : f32 to vector<8x128xf32>
    %84 = arith.mulf %83, %82 : vector<8x128xf32>
    %85 = math.tanh %84 : vector<8x128xf32>
    %cst_41 = arith.constant 1.000000e+00 : f32
    %86 = vector.broadcast %cst_41 : f32 to vector<8x128xf32>
    %87 = arith.addf %86, %85 : vector<8x128xf32>
    %88 = arith.mulf %77, %87 : vector<8x128xf32>
    %89 = arith.truncf %88 : vector<8x128xf32> to vector<8x128xbf16>
    %c0_42 = arith.constant 0 : index
    %c0_43 = arith.constant 0 : index
    %90 = vector.load %arg16[%c0_42, %c0_43] : memref<128x32xbf16, #tpu.memory_space<vmem>>, vector<128x32xbf16>
    %cst_44 = arith.constant dense<0.000000e+00> : vector<8x32xf32>
    %91 = tpu.matmul %89, %90, %cst_44 {dimension_numbers = #tpu.dot_dimension_numbers<[1], [0], [0], [1], [0, 0, 1, 1], [], []>} : vector<8x128xbf16>, vector<128x32xbf16>, vector<8x32xf32> -> vector<8x32xf32>
    %c0_45 = arith.constant 0 : index
    %c0_46 = arith.constant 0 : index
    %92 = vector.load %arg17[%c0_45, %c0_46] : memref<1x32xf32, #tpu.memory_space<vmem>>, vector<1x32xf32>
    %93 = vector.broadcast %92 : vector<1x32xf32> to vector<8x32xf32>
    %94 = arith.addf %91, %93 : vector<8x32xf32>
    %95 = arith.addf %94, %69 : vector<8x32xf32>
    %c0_47 = arith.constant 0 : index
    %c0_48 = arith.constant 0 : index
    %96 = vector.load %arg18[%c0_47, %c0_48] : memref<1x32xf32, #tpu.memory_space<vmem>>, vector<1x32xf32>
    %c0_49 = arith.constant 0 : index
    %c0_50 = arith.constant 0 : index
    %97 = vector.load %arg19[%c0_49, %c0_50] : memref<1x32xf32, #tpu.memory_space<vmem>>, vector<1x32xf32>
    %cst_51 = arith.constant dense<0.000000e+00> : vector<8xf32>
    %98 = vector.multi_reduction <add>, %95, %cst_51 [1] : vector<8x32xf32> to vector<8xf32>
    %99 = vector.shape_cast %98 : vector<8xf32> to vector<8x1xf32>
    %cst_52 = arith.constant 3.200000e+01 : f32
    %100 = vector.broadcast %cst_52 : f32 to vector<8x1xf32>
    %101 = arith.divf %99, %100 : vector<8x1xf32>
    %102 = vector.broadcast %101 : vector<8x1xf32> to vector<8x32xf32>
    %103 = arith.subf %95, %102 : vector<8x32xf32>
    %104 = arith.mulf %103, %103 : vector<8x32xf32>
    %cst_53 = arith.constant dense<0.000000e+00> : vector<8xf32>
    %105 = vector.multi_reduction <add>, %104, %cst_53 [1] : vector<8x32xf32> to vector<8xf32>
    %106 = vector.shape_cast %105 : vector<8xf32> to vector<8x1xf32>
    %cst_54 = arith.constant 3.200000e+01 : f32
    %107 = vector.broadcast %cst_54 : f32 to vector<8x1xf32>
    %108 = arith.divf %106, %107 : vector<8x1xf32>
    %109 = vector.broadcast %101 : vector<8x1xf32> to vector<8x32xf32>
    %110 = arith.subf %95, %109 : vector<8x32xf32>
    %cst_55 = arith.constant 9.99999996E-13 : f32
    %111 = vector.broadcast %cst_55 : f32 to vector<8x1xf32>
    %112 = arith.addf %108, %111 : vector<8x1xf32>
    %113 = math.rsqrt %112 : vector<8x1xf32>
    %114 = vector.broadcast %113 : vector<8x1xf32> to vector<8x32xf32>
    %115 = arith.mulf %110, %114 : vector<8x32xf32>
    %116 = vector.broadcast %96 : vector<1x32xf32> to vector<8x32xf32>
    %117 = arith.mulf %115, %116 : vector<8x32xf32>
    %118 = vector.broadcast %97 : vector<1x32xf32> to vector<8x32xf32>
    %119 = arith.addf %117, %118 : vector<8x32xf32>
    %c0_56 = arith.constant 0 : index
    %c0_57 = arith.constant 0 : index
    %c0_58 = arith.constant 0 : index
    %120 = vector.load %arg20[%c0_56, %c0_57, %c0_58] : memref<1x8x32xf32, #tpu.memory_space<vmem>>, vector<1x8x32xf32>
    %121 = vector.shape_cast %120 : vector<1x8x32xf32> to vector<8x32xf32>
    %122 = vector.shape_cast %119 : vector<8x32xf32> to vector<1x8x32xf32>
    tpu.vector_store %arg20[%c0_56, %c0_57, %c0_58], %122 {strides = array<i32>} : memref<1x8x32xf32, #tpu.memory_space<vmem>>, vector<1x8x32xf32>,
    return
  }
  func.func @transform_0(%arg0: i32, %arg1: i32) -> (i32, i32, i32) {
    %c0_i32 = arith.constant 0 : i32
    %c0_i32_0 = arith.constant 0 : i32
    %c0_i32_1 = arith.constant 0 : i32
    return %arg0, %c0_i32, %c0_i32_0 : i32, i32, i32
  }
  func.func @transform_1(%arg0: i32, %arg1: i32) -> (i32, i32, i32) {
    %c0_i32 = arith.constant 0 : i32
    %c0_i32_0 = arith.constant 0 : i32
    %c0_i32_1 = arith.constant 0 : i32
    return %arg0, %c0_i32, %c0_i32_0 : i32, i32, i32
  }
  func.func @transform_2(%arg0: i32, %arg1: i32) -> (i32, i32) {
    %c0_i32 = arith.constant 0 : i32
    %c0_i32_0 = arith.constant 0 : i32
    %c0_i32_1 = arith.constant 0 : i32
    return %c0_i32, %c0_i32_0 : i32, i32
  }
  func.func @transform_3(%arg0: i32, %arg1: i32) -> (i32, i32) {
    %c0_i32 = arith.constant 0 : i32
    %c0_i32_0 = arith.constant 0 : i32
    %c0_i32_1 = arith.constant 0 : i32
    return %c0_i32, %c0_i32_0 : i32, i32
  }
  func.func @transform_4(%arg0: i32, %arg1: i32) -> (i32, i32) {
    %c0_i32 = arith.constant 0 : i32
    %c0_i32_0 = arith.constant 0 : i32
    %c0_i32_1 = arith.constant 0 : i32
    return %c0_i32, %c0_i32_0 : i32, i32
  }
  func.func @transform_5(%arg0: i32, %arg1: i32) -> (i32, i32) {
    %c0_i32 = arith.constant 0 : i32
    %c0_i32_0 = arith.constant 0 : i32
    %c0_i32_1 = arith.constant 0 : i32
    return %c0_i32, %c0_i32_0 : i32, i32
  }
  func.func @transform_6(%arg0: i32, %arg1: i32) -> (i32, i32) {
    %c0_i32 = arith.constant 0 : i32
    %c0_i32_0 = arith.constant 0 : i32
    %c0_i32_1 = arith.constant 0 : i32
    return %c0_i32, %c0_i32_0 : i32, i32
  }
  func.func @transform_7(%arg0: i32, %arg1: i32) -> (i32, i32) {
    %c0_i32 = arith.constant 0 : i32
    %c0_i32_0 = arith.constant 0 : i32
    %c0_i32_1 = arith.constant 0 : i32
    return %c0_i32, %c0_i32_0 : i32, i32
  }
  func.func @transform_8(%arg0: i32, %arg1: i32) -> (i32, i32) {
    %c0_i32 = arith.constant 0 : i32
    %c0_i32_0 = arith.constant 0 : i32
    %c0_i32_1 = arith.constant 0 : i32
    return %c0_i32, %c0_i32_0 : i32, i32
  }
  func.func @transform_9(%arg0: i32, %arg1: i32) -> (i32, i32) {
    %c0_i32 = arith.constant 0 : i32
    %c0_i32_0 = arith.constant 0 : i32
    %c0_i32_1 = arith.constant 0 : i32
    return %c0_i32, %c0_i32_0 : i32, i32
  }
  func.func @transform_10(%arg0: i32, %arg1: i32) -> (i32, i32) {
    %c0_i32 = arith.constant 0 : i32
    %c0_i32_0 = arith.constant 0 : i32
    %c0_i32_1 = arith.constant 0 : i32
    return %c0_i32, %c0_i32_0 : i32, i32
  }
  func.func @transform_11(%arg0: i32, %arg1: i32) -> (i32, i32) {
    %c0_i32 = arith.constant 0 : i32
    %c0_i32_0 = arith.constant 0 : i32
    %c0_i32_1 = arith.constant 0 : i32
    return %c0_i32, %c0_i32_0 : i32, i32
  }
  func.func @transform_12(%arg0: i32, %arg1: i32) -> (i32, i32) {
    %c0_i32 = arith.constant 0 : i32
    %c0_i32_0 = arith.constant 0 : i32
    %c0_i32_1 = arith.constant 0 : i32
    return %c0_i32, %c0_i32_0 : i32, i32
  }
  func.func @transform_13(%arg0: i32, %arg1: i32) -> (i32, i32) {
    %c0_i32 = arith.constant 0 : i32
    %c0_i32_0 = arith.constant 0 : i32
    %c0_i32_1 = arith.constant 0 : i32
    return %c0_i32, %c0_i32_0 : i32, i32
  }
  func.func @transform_14(%arg0: i32, %arg1: i32) -> (i32, i32) {
    %c0_i32 = arith.constant 0 : i32
    %c0_i32_0 = arith.constant 0 : i32
    %c0_i32_1 = arith.constant 0 : i32
    return %c0_i32, %c0_i32_0 : i32, i32
  }
  func.func @transform_15(%arg0: i32, %arg1: i32) -> (i32, i32) {
    %c0_i32 = arith.constant 0 : i32
    %c0_i32_0 = arith.constant 0 : i32
    %c0_i32_1 = arith.constant 0 : i32
    return %c0_i32, %c0_i32_0 : i32, i32
  }
  func.func @transform_16(%arg0: i32, %arg1: i32) -> (i32, i32) {
    %c0_i32 = arith.constant 0 : i32
    %c0_i32_0 = arith.constant 0 : i32
    %c0_i32_1 = arith.constant 0 : i32
    return %c0_i32, %c0_i32_0 : i32, i32
  }
  func.func @transform_17(%arg0: i32, %arg1: i32) -> (i32, i32) {
    %c0_i32 = arith.constant 0 : i32
    %c0_i32_0 = arith.constant 0 : i32
    %c0_i32_1 = arith.constant 0 : i32
    return %c0_i32, %c0_i32_0 : i32, i32
  }
  func.func @transform_18(%arg0: i32, %arg1: i32) -> (i32, i32, i32) {
    %c0_i32 = arith.constant 0 : i32
    %c0_i32_0 = arith.constant 0 : i32
    return %arg0, %arg1, %c0_i32 : i32, i32, i32
  }
}

</mosaic_0001>

<llo_original>
// kernel: tpu_custom_call.1
$region0: #{tpu_custom_call.1}
  #allocation0 [shape = 'u32[]', space=smem, size = 0x4, offset = 0x4, fixed_abs, tag = 'smem constant byte address 0x4 - core index']
  #allocation1 [shape = 'u32[144,128]{1,0:T(1,128)}', space=vmem, size = 0x12000, scoped, tag = 'internal scratch']
  #allocation2 [shape = 'bf16[4,8,8]{2,1,0:T(8,128)(2,1)}', space=vmem, size = 0x2000, scoped, tag = 'scratch operand']
  #allocation3 [shape = 'bf16[4,8,8]{2,1,0:T(8,128)(2,1)}', space=vmem, size = 0x2000, scoped, tag = 'scratch operand']
  %s0 = inlined_call_operand.hbm [shape: f32[2,8,32], index: 0, kind: input, shape index: {}]
  %s1 = inlined_call_operand.hbm [shape: f32[2,1,8], index: 1, kind: input, shape index: {}]
  %s2 = inlined_call_operand.hbm [shape: bf16[32,32], index: 2, kind: input, shape index: {}]
  %s3 = inlined_call_operand.hbm [shape: f32[1,32], index: 3, kind: input, shape index: {}]
  %s4 = inlined_call_operand.hbm [shape: bf16[32,32], index: 4, kind: input, shape index: {}]
  %s5 = inlined_call_operand.hbm [shape: f32[1,32], index: 5, kind: input, shape index: {}]
  %s6 = inlined_call_operand.hbm [shape: bf16[32,32], index: 6, kind: input, shape index: {}]
  %s7 = inlined_call_operand.hbm [shape: f32[1,32], index: 7, kind: input, shape index: {}]
  %s8 = inlined_call_operand.hbm [shape: bf16[32,32], index: 8, kind: input, shape index: {}]
  %s9 = inlined_call_operand.hbm [shape: f32[1,32], index: 9, kind: input, shape index: {}]
  %s10 = inlined_call_operand.hbm [shape: f32[1,32], index: 10, kind: input, shape index: {}]
  %s11 = inlined_call_operand.hbm [shape: f32[1,32], index: 11, kind: input, shape index: {}]
  %s12 = inlined_call_operand.hbm [shape: bf16[32,128], index: 12, kind: input, shape index: {}]
  %s13 = inlined_call_operand.hbm [shape: f32[1,128], index: 13, kind: input, shape index: {}]
  %s14 = inlined_call_operand.hbm [shape: bf16[128,32], index: 14, kind: input, shape index: {}]
  %s15 = inlined_call_operand.hbm [shape: f32[1,32], index: 15, kind: input, shape index: {}]
  %s16 = inlined_call_operand.hbm [shape: f32[1,32], index: 16, kind: input, shape index: {}]
  %s17 = inlined_call_operand.hbm [shape: f32[1,32], index: 17, kind: input, shape index: {}]
  %s18 = inlined_call_operand.hbm [shape: f32[2,8,32], index: 18, kind: output, shape index: {}]
  %s19 = sld [smem:[#allocation0]]
  $region181: #{tpu_custom_call.1} parent=0
    _
  %s21 = ssub.s32 1, %s19
  %s22 = scalar_select 0, %s21, %s19
  $region1: #{tpu_custom_call.1} parent=0
    #allocation4 [shape = 'u8[8192]{0}', space=vmem, size = 0x2000, scoped, tag = 'input window, operand 0']
    #allocation5 [shape = 's32[2]{0}', space=sflag, size = 0x8, scoped, tag = 'scoped memory for tpu_custom_call.1']
    #allocation6 [shape = 's32[2]{0}', space=sflag, size = 0x8, scoped, tag = 'scoped memory for tpu_custom_call.1']
    #allocation7 [shape = 'u8[1024]{0}', space=vmem, size = 0x400, scoped, tag = 'input window, operand 1']
    #allocation8 [shape = 's32[2]{0}', space=sflag, size = 0x8, scoped, tag = 'scoped memory for tpu_custom_call.1']
    #allocation9 [shape = 'u8[8192]{0}', space=vmem, size = 0x2000, scoped, tag = 'input window, operand 2, single buffered']
    #allocation10 [shape = 'u8[512]{0}', space=vmem, size = 0x400, scoped, tag = 'input window, operand 3, single buffered']
    #allocation11 [shape = 's32[1]{0}', space=sflag, size = 0x4, scoped, tag = 'scoped memory for tpu_custom_call.1']
    #allocation12 [shape = 'u8[8192]{0}', space=vmem, size = 0x2000, scoped, tag = 'input window, operand 4, single buffered']
    #allocation13 [shape = 'u8[512]{0}', space=vmem, size = 0x400, scoped, tag = 'input window, operand 5, single buffered']
    #allocation14 [shape = 's32[1]{0}', space=sflag, size = 0x4, scoped, tag = 'scoped memory for tpu_custom_call.1']
    #allocation15 [shape = 'u8[8192]{0}', space=vmem, size = 0x2000, scoped, tag = 'input window, operand 6, single buffered']
    #allocation16 [shape = 'u8[512]{0}', space=vmem, size = 0x400, scoped, tag = 'input window, operand 7, single buffered']
    #allocation17 [shape = 's32[1]{0}', space=sflag, size = 0x4, scoped, tag = 'scoped memory for tpu_custom_call.1']
    #allocation18 [shape = 'u8[8192]{0}', space=vmem, size = 0x2000, scoped, tag = 'input window, operand 8, single buffered']
    #allocation19 [shape = 'u8[512]{0}', space=vmem, size = 0x400, scoped, tag = 'input window, operand 9, single buffered']
    #allocation20 [shape = 's32[1]{0}', space=sflag, size = 0x4, scoped, tag = 'scoped memory for tpu_custom_call.1']
    #allocation21 [shape = 'u8[512]{0}', space=vmem, size = 0x400, scoped, tag = 'input window, operand 10, single buffered']
    #allocation22 [shape = 'u8[512]{0}', space=vmem, size = 0x400, scoped, tag = 'input window, operand 11, single buffered']
    #allocation23 [shape = 's32[1]{0}', space=sflag, size = 0x4, scoped, tag = 'scoped memory for tpu_custom_call.1']
    #allocation24 [shape = 'u8[8192]{0}', space=vmem, size = 0x2000, scoped, tag = 'input window, operand 12, single buffered']
    #allocation25 [shape = 'u8[512]{0}', space=vmem, size = 0x400, scoped, tag = 'input window, operand 13, single buffered']
    #allocation26 [shape = 's32[1]{0}', space=sflag, size = 0x4, scoped, tag = 'scoped memory for tpu_custom_call.1']
    #allocation27 [shape = 'u8[32768]{0}', space=vmem, size = 0x8000, scoped, tag = 'input window, operand 14, single buffered']
    #allocation28 [shape = 'u8[512]{0}', space=vmem, size = 0x400, scoped, tag = 'input window, operand 15, single buffered']
    #allocation29 [shape = 's32[1]{0}', space=sflag, size = 0x4, scoped, tag = 'scoped memory for tpu_custom_call.1']
    #allocation30 [shape = 'u8[512]{0}', space=vmem, size = 0x400, scoped, tag = 'input window, operand 16, single buffered']
    #allocation31 [shape = 'u8[512]{0}', space=vmem, size = 0x400, scoped, tag = 'input window, operand 17, single buffered']
    #allocation32 [shape = 's32[1]{0}', space=sflag, size = 0x4, scoped, tag = 'scoped memory for tpu_custom_call.1']
    #allocation33 [shape = 'u8[8192]{0}', space=vmem, size = 0x2000, scoped, tag = 'output window, operand 0']
    %23 = vsyncpa [#allocation5], 0
    %s24 = scalar_lea.sflag [#allocation5], 1
    %25 = vsyncpa %s24, 0
    %26 = vsyncpa [#allocation8], 0
    %s27 = scalar_lea.sflag [#allocation8], 1
    %28 = vsyncpa %s27, 0
    %29 = vsyncpa [#allocation11], 0
    %30 = vsyncpa [#allocation14], 0
    %31 = vsyncpa [#allocation17], 0
    %32 = vsyncpa [#allocation20], 0
    %33 = vsyncpa [#allocation23], 0
    %34 = vsyncpa [#allocation26], 0
    %35 = vsyncpa [#allocation29], 0
    %36 = vsyncpa [#allocation32], 0
    %37 = vsyncpa [#allocation6], 0
    %s38 = scalar_lea.sflag [#allocation6], 1
    %39 = vsyncpa %s38, 0
    loop: start=0, step=1, limit=4
    $region2: #{tpu_custom_call.1} parent=1 // loop_pre_header
      _
    $region3: #{tpu_custom_call.1} parent=1 // loop_header
      %s41 = sphi 0, %s45
      %p42 = scmp.ge.s32.totalorder %s41, 4
      %s48 = sphi 0, %s60
      %s49 = sphi 0, %s56
      %s50 = sphi 0, %s48
      %s51 = sphi 0, %s49
      %s52 = sphi 0, %s50
      %s53 = sphi 0, %s51
      %s63 = sphi 0, %s65
      %s66 = sphi 0, %s63
      %s67 = sphi 0, %s66
      %s83 = sphi 0, %s67
      %s89 = sphi 0, %s91
      %s92 = sphi 0, %s89
      %s93 = sphi 0, %s92
      %s109 = sphi 0, %s93
      %s113 = sphi 0, %s113
      %s115 = sphi 0, %s113
      %s116 = sphi 0, %s115
      %s130 = sphi 0, %s116
      %s134 = sphi 0, %s134
      %s136 = sphi 0, %s134
      %s137 = sphi 0, %s136
      %s151 = sphi 0, %s137
      %s155 = sphi 0, %s155
      %s157 = sphi 0, %s155
      %s158 = sphi 0, %s157
      %s172 = sphi 0, %s158
      %s176 = sphi 0, %s176
      %s178 = sphi 0, %s176
      %s179 = sphi 0, %s178
      %s193 = sphi 0, %s179
      %s197 = sphi 0, %s197
      %s199 = sphi 0, %s197
      %s200 = sphi 0, %s199
      %s214 = sphi 0, %s200
      %s218 = sphi 0, %s218
      %s220 = sphi 0, %s218
      %s221 = sphi 0, %s220
      %s235 = sphi 0, %s221
      %s239 = sphi 0, %s239
      %s241 = sphi 0, %s239
      %s242 = sphi 0, %s241
      %s256 = sphi 0, %s242
      %s260 = sphi 0, %s260
      %s262 = sphi 0, %s260
      %s263 = sphi 0, %s262
      %s277 = sphi 0, %s263
      %s281 = sphi 0, %s281
      %s283 = sphi 0, %s281
      %s284 = sphi 0, %s283
      %s298 = sphi 0, %s284
      %s302 = sphi 0, %s302
      %s304 = sphi 0, %s302
      %s305 = sphi 0, %s304
      %s319 = sphi 0, %s305
      %s323 = sphi 0, %s323
      %s325 = sphi 0, %s323
      %s326 = sphi 0, %s325
      %s340 = sphi 0, %s326
      %s344 = sphi 0, %s344
      %s346 = sphi 0, %s344
      %s347 = sphi 0, %s346
      %s361 = sphi 0, %s347
      %s365 = sphi 0, %s365
      %s367 = sphi 0, %s365
      %s368 = sphi 0, %s367
      %s382 = sphi 0, %s368
      %s386 = sphi 0, %s386
      %s388 = sphi 0, %s386
      %s389 = sphi 0, %s388
      %s403 = sphi 0, %s389
      %s407 = sphi 0, %s407
      %s409 = sphi 0, %s407
      %s410 = sphi 0, %s409
      %s424 = sphi 0, %s410
      %s428 = sphi 0, %s428
      %s430 = sphi 0, %s428
      %s431 = sphi 0, %s430
      %s445 = sphi 0, %s431
      %s453 = sphi 0, %s455
      %s456 = sphi 0, %s453
      %s457 = sphi 0, %s456
      %s473 = sphi 0, %s457
    $region4: #{tpu_custom_call.1} parent=1 // loop_header_branch
      %44 = sbr.rel (%p42) target = $region8
    $region5: #{tpu_custom_call.1} parent=1 // loop_body
      %s46 = ssub.s32 %s41, 1
      %s47 = ssub.s32 %s41, 2
      %s54 = sadd.s32 1, %s49
      %p55 = scmp.ge.s32.totalorder %s54, 1
      %s56 = scalar_select %p55, 0, %s54
      %s57 = sadd.s32 1, %s48
      %s58 = scalar_select %p55, %s57, %s48
      %p59 = scmp.ge.s32.totalorder %s58, 2
      %s60 = scalar_select %p59, 0, %s58
      %s61 = ssub.s32 %s48, %s60
      %p62 = scmp.eq.s32.totalorder %s61, 0
      %s64 = sadd.s32 %s63, 1
      %s65 = scalar_select %p62, %s63, %s64
      %p68 = pneg %p62
      %p69 = scmp.eq.s32.totalorder %s41, 1
      %p70 = por %p68, %p69
      %p71 = scmp.ne.s32.totalorder %s63, %s66
      %p72 = scmp.eq.s32.totalorder %s41, 0
      %p73 = por %p71, %p72
      %p74 = scmp.ne.s32.totalorder %s63, %s66
      %p75 = scmp.eq.s32.totalorder %s46, 1
      %p76 = por %p74, %p75
      %p77 = scmp.ne.s32.totalorder %s66, %s67
      %p78 = scmp.eq.s32.totalorder %s46, 0
      %p79 = por %p77, %p78
      %p80 = scmp.ne.s32.totalorder %s66, %s67
      %p81 = scmp.eq.s32.totalorder %s47, 1
      %p82 = por %p80, %p81
      %p84 = scmp.ne.s32.totalorder %s67, %s83
      %p85 = scmp.eq.s32.totalorder %s47, 0
      %p86 = por %p84, %p85
      %s87 = ssub.s32 %s48, %s60
      %p88 = scmp.eq.s32.totalorder %s87, 0
      %s90 = sadd.s32 %s89, 1
      %s91 = scalar_select %p88, %s89, %s90
      %p94 = pneg %p88
      %p95 = scmp.eq.s32.totalorder %s41, 1
      %p96 = por %p94, %p95
      %p97 = scmp.ne.s32.totalorder %s89, %s92
      %p98 = scmp.eq.s32.totalorder %s41, 0
      %p99 = por %p97, %p98
      %p100 = scmp.ne.s32.totalorder %s89, %s92
      %p101 = scmp.eq.s32.totalorder %s46, 1
      %p102 = por %p100, %p101
      %p103 = scmp.ne.s32.totalorder %s92, %s93
      %p104 = scmp.eq.s32.totalorder %s46, 0
      %p105 = por %p103, %p104
      %p106 = scmp.ne.s32.totalorder %s92, %s93
      %p107 = scmp.eq.s32.totalorder %s47, 1
      %p108 = por %p106, %p107
      %p110 = scmp.ne.s32.totalorder %s93, %s109
      %p111 = scmp.eq.s32.totalorder %s47, 0
      %p112 = por %p110, %p111
      %s114 = sadd.s32 %s113, 1
      %p117 = scmp.eq.s32.totalorder %s41, 1
      %p118 = scmp.ne.s32.totalorder %s113, %s115
      %p119 = scmp.eq.s32.totalorder %s41, 0
      %p120 = por %p118, %p119
      %p121 = scmp.ne.s32.totalorder %s113, %s115
      %p122 = scmp.eq.s32.totalorder %s46, 1
      %p123 = por %p121, %p122
      %p124 = scmp.ne.s32.totalorder %s115, %s116
      %p125 = scmp.eq.s32.totalorder %s46, 0
      %p126 = por %p124, %p125
      %p127 = scmp.ne.s32.totalorder %s115, %s116
      %p128 = scmp.eq.s32.totalorder %s47, 1
      %p129 = por %p127, %p128
      %p131 = scmp.ne.s32.totalorder %s116, %s130
      %p132 = scmp.eq.s32.totalorder %s47, 0
      %p133 = por %p131, %p132
      %s135 = sadd.s32 %s134, 1
      %p138 = scmp.eq.s32.totalorder %s41, 1
      %p139 = scmp.ne.s32.totalorder %s134, %s136
      %p140 = scmp.eq.s32.totalorder %s41, 0
      %p141 = por %p139, %p140
      %p142 = scmp.ne.s32.totalorder %s134, %s136
      %p143 = scmp.eq.s32.totalorder %s46, 1
      %p144 = por %p142, %p143
      %p145 = scmp.ne.s32.totalorder %s136, %s137
      %p146 = scmp.eq.s32.totalorder %s46, 0
      %p147 = por %p145, %p146
      %p148 = scmp.ne.s32.totalorder %s136, %s137
      %p149 = scmp.eq.s32.totalorder %s47, 1
      %p150 = por %p148, %p149
      %p152 = scmp.ne.s32.totalorder %s137, %s151
      %p153 = scmp.eq.s32.totalorder %s47, 0
      %p154 = por %p152, %p153
      %s156 = sadd.s32 %s155, 1
      %p159 = scmp.eq.s32.totalorder %s41, 1
      %p160 = scmp.ne.s32.totalorder %s155, %s157
      %p161 = scmp.eq.s32.totalorder %s41, 0
      %p162 = por %p160, %p161
      %p163 = scmp.ne.s32.totalorder %s155, %s157
      %p164 = scmp.eq.s32.totalorder %s46, 1
      %p165 = por %p163, %p164
      %p166 = scmp.ne.s32.totalorder %s157, %s158
      %p167 = scmp.eq.s32.totalorder %s46, 0
      %p168 = por %p166, %p167
      %p169 = scmp.ne.s32.totalorder %s157, %s158
      %p170 = scmp.eq.s32.totalorder %s47, 1
      %p171 = por %p169, %p170
      %p173 = scmp.ne.s32.totalorder %s158, %s172
      %p174 = scmp.eq.s32.totalorder %s47, 0
      %p175 = por %p173, %p174
      %s177 = sadd.s32 %s176, 1
      %p180 = scmp.eq.s32.totalorder %s41, 1
      %p181 = scmp.ne.s32.totalorder %s176, %s178
      %p182 = scmp.eq.s32.totalorder %s41, 0
      %p183 = por %p181, %p182
      %p184 = scmp.ne.s32.totalorder %s176, %s178
      %p185 = scmp.eq.s32.totalorder %s46, 1
      %p186 = por %p184, %p185
      %p187 = scmp.ne.s32.totalorder %s178, %s179
      %p188 = scmp.eq.s32.totalorder %s46, 0
      %p189 = por %p187, %p188
      %p190 = scmp.ne.s32.totalorder %s178, %s179
      %p191 = scmp.eq.s32.totalorder %s47, 1
      %p192 = por %p190, %p191
      %p194 = scmp.ne.s32.totalorder %s179, %s193
      %p195 = scmp.eq.s32.totalorder %s47, 0
      %p196 = por %p194, %p195
      %s198 = sadd.s32 %s197, 1
      %p201 = scmp.eq.s32.totalorder %s41, 1
      %p202 = scmp.ne.s32.totalorder %s197, %s199
      %p203 = scmp.eq.s32.totalorder %s41, 0
      %p204 = por %p202, %p203
      %p205 = scmp.ne.s32.totalorder %s197, %s199
      %p206 = scmp.eq.s32.totalorder %s46, 1
      %p207 = por %p205, %p206
      %p208 = scmp.ne.s32.totalorder %s199, %s200
      %p209 = scmp.eq.s32.totalorder %s46, 0
      %p210 = por %p208, %p209
      %p211 = scmp.ne.s32.totalorder %s199, %s200
      %p212 = scmp.eq.s32.totalorder %s47, 1
      %p213 = por %p211, %p212
      %p215 = scmp.ne.s32.totalorder %s200, %s214
      %p216 = scmp.eq.s32.totalorder %s47, 0
      %p217 = por %p215, %p216
      %s219 = sadd.s32 %s218, 1
      %p222 = scmp.eq.s32.totalorder %s41, 1
      %p223 = scmp.ne.s32.totalorder %s218, %s220
      %p224 = scmp.eq.s32.totalorder %s41, 0
      %p225 = por %p223, %p224
      %p226 = scmp.ne.s32.totalorder %s218, %s220
      %p227 = scmp.eq.s32.totalorder %s46, 1
      %p228 = por %p226, %p227
      %p229 = scmp.ne.s32.totalorder %s220, %s221
      %p230 = scmp.eq.s32.totalorder %s46, 0
      %p231 = por %p229, %p230
      %p232 = scmp.ne.s32.totalorder %s220, %s221
      %p233 = scmp.eq.s32.totalorder %s47, 1
      %p234 = por %p232, %p233
      %p236 = scmp.ne.s32.totalorder %s221, %s235
      %p237 = scmp.eq.s32.totalorder %s47, 0
      %p238 = por %p236, %p237
      %s240 = sadd.s32 %s239, 1
      %p243 = scmp.eq.s32.totalorder %s41, 1
      %p244 = scmp.ne.s32.totalorder %s239, %s241
      %p245 = scmp.eq.s32.totalorder %s41, 0
      %p246 = por %p244, %p245
      %p247 = scmp.ne.s32.totalorder %s239, %s241
      %p248 = scmp.eq.s32.totalorder %s46, 1
      %p249 = por %p247, %p248
      %p250 = scmp.ne.s32.totalorder %s241, %s242
      %p251 = scmp.eq.s32.totalorder %s46, 0
      %p252 = por %p250, %p251
      %p253 = scmp.ne.s32.totalorder %s241, %s242
      %p254 = scmp.eq.s32.totalorder %s47, 1
      %p255 = por %p253, %p254
      %p257 = scmp.ne.s32.totalorder %s242, %s256
      %p258 = scmp.eq.s32.totalorder %s47, 0
      %p259 = por %p257, %p258
      %s261 = sadd.s32 %s260, 1
      %p264 = scmp.eq.s32.totalorder %s41, 1
      %p265 = scmp.ne.s32.totalorder %s260, %s262
      %p266 = scmp.eq.s32.totalorder %s41, 0
      %p267 = por %p265, %p266
      %p268 = scmp.ne.s32.totalorder %s260, %s262
      %p269 = scmp.eq.s32.totalorder %s46, 1
      %p270 = por %p268, %p269
      %p271 = scmp.ne.s32.totalorder %s262, %s263
      %p272 = scmp.eq.s32.totalorder %s46, 0
      %p273 = por %p271, %p272
      %p274 = scmp.ne.s32.totalorder %s262, %s263
      %p275 = scmp.eq.s32.totalorder %s47, 1
      %p276 = por %p274, %p275
      %p278 = scmp.ne.s32.totalorder %s263, %s277
      %p279 = scmp.eq.s32.totalorder %s47, 0
      %p280 = por %p278, %p279
      %s282 = sadd.s32 %s281, 1
      %p285 = scmp.eq.s32.totalorder %s41, 1
      %p286 = scmp.ne.s32.totalorder %s281, %s283
      %p287 = scmp.eq.s32.totalorder %s41, 0
      %p288 = por %p286, %p287
      %p289 = scmp.ne.s32.totalorder %s281, %s283
      %p290 = scmp.eq.s32.totalorder %s46, 1
      %p291 = por %p289, %p290
      %p292 = scmp.ne.s32.totalorder %s283, %s284
      %p293 = scmp.eq.s32.totalorder %s46, 0
      %p294 = por %p292, %p293
      %p295 = scmp.ne.s32.totalorder %s283, %s284
      %p296 = scmp.eq.s32.totalorder %s47, 1
      %p297 = por %p295, %p296
      %p299 = scmp.ne.s32.totalorder %s284, %s298
      %p300 = scmp.eq.s32.totalorder %s47, 0
      %p301 = por %p299, %p300
      %s303 = sadd.s32 %s302, 1
      %p306 = scmp.eq.s32.totalorder %s41, 1
      %p307 = scmp.ne.s32.totalorder %s302, %s304
      %p308 = scmp.eq.s32.totalorder %s41, 0
      %p309 = por %p307, %p308
      %p310 = scmp.ne.s32.totalorder %s302, %s304
      %p311 = scmp.eq.s32.totalorder %s46, 1
      %p312 = por %p310, %p311
      %p313 = scmp.ne.s32.totalorder %s304, %s305
      %p314 = scmp.eq.s32.totalorder %s46, 0
      %p315 = por %p313, %p314
      %p316 = scmp.ne.s32.totalorder %s304, %s305
      %p317 = scmp.eq.s32.totalorder %s47, 1
      %p318 = por %p316, %p317
      %p320 = scmp.ne.s32.totalorder %s305, %s319
      %p321 = scmp.eq.s32.totalorder %s47, 0
      %p322 = por %p320, %p321
      %s324 = sadd.s32 %s323, 1
      %p327 = scmp.eq.s32.totalorder %s41, 1
      %p328 = scmp.ne.s32.totalorder %s323, %s325
      %p329 = scmp.eq.s32.totalorder %s41, 0
      %p330 = por %p328, %p329
      %p331 = scmp.ne.s32.totalorder %s323, %s325
      %p332 = scmp.eq.s32.totalorder %s46, 1
      %p333 = por %p331, %p332
      %p334 = scmp.ne.s32.totalorder %s325, %s326
      %p335 = scmp.eq.s32.totalorder %s46, 0
      %p336 = por %p334, %p335
      %p337 = scmp.ne.s32.totalorder %s325, %s326
      %p338 = scmp.eq.s32.totalorder %s47, 1
      %p339 = por %p337, %p338
      %p341 = scmp.ne.s32.totalorder %s326, %s340
      %p342 = scmp.eq.s32.totalorder %s47, 0
      %p343 = por %p341, %p342
      %s345 = sadd.s32 %s344, 1
      %p348 = scmp.eq.s32.totalorder %s41, 1
      %p349 = scmp.ne.s32.totalorder %s344, %s346
      %p350 = scmp.eq.s32.totalorder %s41, 0
      %p351 = por %p349, %p350
      %p352 = scmp.ne.s32.totalorder %s344, %s346
      %p353 = scmp.eq.s32.totalorder %s46, 1
      %p354 = por %p352, %p353
      %p355 = scmp.ne.s32.totalorder %s346, %s347
      %p356 = scmp.eq.s32.totalorder %s46, 0
      %p357 = por %p355, %p356
      %p358 = scmp.ne.s32.totalorder %s346, %s347
      %p359 = scmp.eq.s32.totalorder %s47, 1
      %p360 = por %p358, %p359
      %p362 = scmp.ne.s32.totalorder %s347, %s361
      %p363 = scmp.eq.s32.totalorder %s47, 0
      %p364 = por %p362, %p363
      %s366 = sadd.s32 %s365, 1
      %p369 = scmp.eq.s32.totalorder %s41, 1
      %p370 = scmp.ne.s32.totalorder %s365, %s367
      %p371 = scmp.eq.s32.totalorder %s41, 0
      %p372 = por %p370, %p371
      %p373 = scmp.ne.s32.totalorder %s365, %s367
      %p374 = scmp.eq.s32.totalorder %s46, 1
      %p375 = por %p373, %p374
      %p376 = scmp.ne.s32.totalorder %s367, %s368
      %p377 = scmp.eq.s32.totalorder %s46, 0
      %p378 = por %p376, %p377
      %p379 = scmp.ne.s32.totalorder %s367, %s368
      %p380 = scmp.eq.s32.totalorder %s47, 1
      %p381 = por %p379, %p380
      %p383 = scmp.ne.s32.totalorder %s368, %s382
      %p384 = scmp.eq.s32.totalorder %s47, 0
      %p385 = por %p383, %p384
      %s387 = sadd.s32 %s386, 1
      %p390 = scmp.eq.s32.totalorder %s41, 1
      %p391 = scmp.ne.s32.totalorder %s386, %s388
      %p392 = scmp.eq.s32.totalorder %s41, 0
      %p393 = por %p391, %p392
      %p394 = scmp.ne.s32.totalorder %s386, %s388
      %p395 = scmp.eq.s32.totalorder %s46, 1
      %p396 = por %p394, %p395
      %p397 = scmp.ne.s32.totalorder %s388, %s389
      %p398 = scmp.eq.s32.totalorder %s46, 0
      %p399 = por %p397, %p398
      %p400 = scmp.ne.s32.totalorder %s388, %s389
      %p401 = scmp.eq.s32.totalorder %s47, 1
      %p402 = por %p400, %p401
      %p404 = scmp.ne.s32.totalorder %s389, %s403
      %p405 = scmp.eq.s32.totalorder %s47, 0
      %p406 = por %p404, %p405
      %s408 = sadd.s32 %s407, 1
      %p411 = scmp.eq.s32.totalorder %s41, 1
      %p412 = scmp.ne.s32.totalorder %s407, %s409
      %p413 = scmp.eq.s32.totalorder %s41, 0
      %p414 = por %p412, %p413
      %p415 = scmp.ne.s32.totalorder %s407, %s409
      %p416 = scmp.eq.s32.totalorder %s46, 1
      %p417 = por %p415, %p416
      %p418 = scmp.ne.s32.totalorder %s409, %s410
      %p419 = scmp.eq.s32.totalorder %s46, 0
      %p420 = por %p418, %p419
      %p421 = scmp.ne.s32.totalorder %s409, %s410
      %p422 = scmp.eq.s32.totalorder %s47, 1
      %p423 = por %p421, %p422
      %p425 = scmp.ne.s32.totalorder %s410, %s424
      %p426 = scmp.eq.s32.totalorder %s47, 0
      %p427 = por %p425, %p426
      %s429 = sadd.s32 %s428, 1
      %p432 = scmp.eq.s32.totalorder %s41, 1
      %p433 = scmp.ne.s32.totalorder %s428, %s430
      %p434 = scmp.eq.s32.totalorder %s41, 0
      %p435 = por %p433, %p434
      %p436 = scmp.ne.s32.totalorder %s428, %s430
      %p437 = scmp.eq.s32.totalorder %s46, 1
      %p438 = por %p436, %p437
      %p439 = scmp.ne.s32.totalorder %s430, %s431
      %p440 = scmp.eq.s32.totalorder %s46, 0
      %p441 = por %p439, %p440
      %p442 = scmp.ne.s32.totalorder %s430, %s431
      %p443 = scmp.eq.s32.totalorder %s47, 1
      %p444 = por %p442, %p443
      %p446 = scmp.ne.s32.totalorder %s431, %s445
      %p447 = scmp.eq.s32.totalorder %s47, 0
      %p448 = por %p446, %p447
      %s449 = ssub.s32 %s48, %s60
      %s450 = ssub.s32 %s49, %s56
      %s451 = sor.u32 %s449, %s450
      %p452 = scmp.eq.s32.totalorder %s451, 0
      %s454 = sadd.s32 %s453, 1
      %s455 = scalar_select %p452, %s453, %s454
      %p458 = pneg %p452
      %p459 = scmp.eq.s32.totalorder %s41, 1
      %p460 = por %p458, %p459
      %p461 = scmp.ne.s32.totalorder %s453, %s456
      %p462 = scmp.eq.s32.totalorder %s41, 0
      %p463 = por %p461, %p462
      %p464 = scmp.ne.s32.totalorder %s453, %s456
      %p465 = scmp.eq.s32.totalorder %s46, 1
      %p466 = por %p464, %p465
      %p467 = scmp.ne.s32.totalorder %s456, %s457
      %p468 = scmp.eq.s32.totalorder %s46, 0
      %p469 = por %p467, %p468
      %p470 = scmp.ne.s32.totalorder %s456, %s457
      %p471 = scmp.eq.s32.totalorder %s47, 1
      %p472 = por %p470, %p471
      %p474 = scmp.ne.s32.totalorder %s457, %s473
      %p475 = scmp.eq.s32.totalorder %s47, 0
      %p476 = por %p474, %p475
      %p477 = scmp.le.s32.totalorder 1, %s41
      %p478 = scmp.lt.s32.totalorder %s41, 3
      %p479 = pnand %p477, %p478
      %p480 = pneg %p479
      // Predicated region
      $region9: #{tpu_custom_call.1} parent=5 // pred_check
        _
      $region10: #{tpu_custom_call.1} parent=5 // pred_check_branch
        %482 = sbr.rel (%p479) target = $region12
      $region11: #{tpu_custom_call.1} parent=5 // pred_region
        %s483 = ssub.s32 %s41, 1
        // Predicated region
        $region13: #{tpu_custom_call.1} parent=11 // pred_check
          %p484 = pneg %p126
        $region14: #{tpu_custom_call.1} parent=11 // pred_check_branch
          %486 = sbr.rel (%p484) target = $region16
        $region15: #{tpu_custom_call.1} parent=11 // pred_region
          %s488 = ssub.s32 256, 256
          %489 = vsyncadd [#allocation8], %s488
          %s490 = sshll.u32 [#allocation9], 4
          %s491 = int_to_ptr.vmem [resolvable:$true] %s490
          %496 = dma.hbm_to_vmem [thread:$0]  %s2, 256, %s491, [#allocation8], 64, 64, 4
        $region16: #{tpu_custom_call.1} parent=11 // pred_fallthru
          _
        // Predicated region
        $region17: #{tpu_custom_call.1} parent=11 // pred_check
          %p497 = pneg %p147
        $region18: #{tpu_custom_call.1} parent=11 // pred_check_branch
          %499 = sbr.rel (%p497) target = $region20
        $region19: #{tpu_custom_call.1} parent=11 // pred_region
          %s501 = ssub.s32 16, 16
          %502 = vsyncadd [#allocation11], %s501
          %s504 = sshll.u32 [#allocation10], 4
          %s505 = int_to_ptr.vmem [resolvable:$true] %s504
          %507 = dma.hbm_to_vmem [thread:$0]  %s3, 16, %s505, [#allocation11]
        $region20: #{tpu_custom_call.1} parent=11 // pred_fallthru
          _
        // Predicated region
        $region21: #{tpu_custom_call.1} parent=11 // pred_check
          %p508 = pneg %p168
        $region22: #{tpu_custom_call.1} parent=11 // pred_check_branch
          %510 = sbr.rel (%p508) target = $region24
        $region23: #{tpu_custom_call.1} parent=11 // pred_region
          %s512 = ssub.s32 256, 256
          %513 = vsyncadd [#allocation11], %s512
          %s514 = sshll.u32 [#allocation12], 4
          %s515 = int_to_ptr.vmem [resolvable:$true] %s514
          %520 = dma.hbm_to_vmem [thread:$0]  %s4, 256, %s515, [#allocation11], 64, 64, 4
        $region24: #{tpu_custom_call.1} parent=11 // pred_fallthru
          _
        // Predicated region
        $region25: #{tpu_custom_call.1} parent=11 // pred_check
          %p521 = pneg %p189
        $region26: #{tpu_custom_call.1} parent=11 // pred_check_branch
          %523 = sbr.rel (%p521) target = $region28
        $region27: #{tpu_custom_call.1} parent=11 // pred_region
          %s525 = ssub.s32 16, 16
          %526 = vsyncadd [#allocation14], %s525
          %s528 = sshll.u32 [#allocation13], 4
          %s529 = int_to_ptr.vmem [resolvable:$true] %s528
          %531 = dma.hbm_to_vmem [thread:$0]  %s5, 16, %s529, [#allocation14]
        $region28: #{tpu_custom_call.1} parent=11 // pred_fallthru
          _
        // Predicated region
        $region29: #{tpu_custom_call.1} parent=11 // pred_check
          %p532 = pneg %p210
        $region30: #{tpu_custom_call.1} parent=11 // pred_check_branch
          %534 = sbr.rel (%p532) target = $region32
        $region31: #{tpu_custom_call.1} parent=11 // pred_region
          %s536 = ssub.s32 256, 256
          %537 = vsyncadd [#allocation14], %s536
          %s538 = sshll.u32 [#allocation15], 4
          %s539 = int_to_ptr.vmem [resolvable:$true] %s538
          %544 = dma.hbm_to_vmem [thread:$0]  %s6, 256, %s539, [#allocation14], 64, 64, 4
        $region32: #{tpu_custom_call.1} parent=11 // pred_fallthru
          _
        // Predicated region
        $region33: #{tpu_custom_call.1} parent=11 // pred_check
          %p545 = pneg %p231
        $region34: #{tpu_custom_call.1} parent=11 // pred_check_branch
          %547 = sbr.rel (%p545) target = $region36
        $region35: #{tpu_custom_call.1} parent=11 // pred_region
          %s549 = ssub.s32 16, 16
          %550 = vsyncadd [#allocation17], %s549
          %s552 = sshll.u32 [#allocation16], 4
          %s553 = int_to_ptr.vmem [resolvable:$true] %s552
          %555 = dma.hbm_to_vmem [thread:$0]  %s7, 16, %s553, [#allocation17]
        $region36: #{tpu_custom_call.1} parent=11 // pred_fallthru
          _
        // Predicated region
        $region37: #{tpu_custom_call.1} parent=11 // pred_check
          %p556 = pneg %p252
        $region38: #{tpu_custom_call.1} parent=11 // pred_check_branch
          %558 = sbr.rel (%p556) target = $region40
        $region39: #{tpu_custom_call.1} parent=11 // pred_region
          %s560 = ssub.s32 256, 256
          %561 = vsyncadd [#allocation17], %s560
          %s562 = sshll.u32 [#allocation18], 4
          %s563 = int_to_ptr.vmem [resolvable:$true] %s562
          %568 = dma.hbm_to_vmem [thread:$0]  %s8, 256, %s563, [#allocation17], 64, 64, 4
        $region40: #{tpu_custom_call.1} parent=11 // pred_fallthru
          _
        // Predicated region
        $region41: #{tpu_custom_call.1} parent=11 // pred_check
          %p569 = pneg %p273
        $region42: #{tpu_custom_call.1} parent=11 // pred_check_branch
          %571 = sbr.rel (%p569) target = $region44
        $region43: #{tpu_custom_call.1} parent=11 // pred_region
          %s573 = ssub.s32 16, 16
          %574 = vsyncadd [#allocation20], %s573
          %s576 = sshll.u32 [#allocation19], 4
          %s577 = int_to_ptr.vmem [resolvable:$true] %s576
          %579 = dma.hbm_to_vmem [thread:$0]  %s9, 16, %s577, [#allocation20]
        $region44: #{tpu_custom_call.1} parent=11 // pred_fallthru
          _
        // Predicated region
        $region45: #{tpu_custom_call.1} parent=11 // pred_check
          %p580 = pneg %p294
        $region46: #{tpu_custom_call.1} parent=11 // pred_check_branch
          %582 = sbr.rel (%p580) target = $region48
        $region47: #{tpu_custom_call.1} parent=11 // pred_region
          %s584 = ssub.s32 16, 16
          %585 = vsyncadd [#allocation20], %s584
          %s587 = sshll.u32 [#allocation21], 4
          %s588 = int_to_ptr.vmem [resolvable:$true] %s587
          %590 = dma.hbm_to_vmem [thread:$0]  %s10, 16, %s588, [#allocation20]
        $region48: #{tpu_custom_call.1} parent=11 // pred_fallthru
          _
        // Predicated region
        $region49: #{tpu_custom_call.1} parent=11 // pred_check
          %p591 = pneg %p315
        $region50: #{tpu_custom_call.1} parent=11 // pred_check_branch
          %593 = sbr.rel (%p591) target = $region52
        $region51: #{tpu_custom_call.1} parent=11 // pred_region
          %s595 = ssub.s32 16, 16
          %596 = vsyncadd [#allocation23], %s595
          %s598 = sshll.u32 [#allocation22], 4
          %s599 = int_to_ptr.vmem [resolvable:$true] %s598
          %601 = dma.hbm_to_vmem [thread:$0]  %s11, 16, %s599, [#allocation23]
        $region52: #{tpu_custom_call.1} parent=11 // pred_fallthru
          _
        // Predicated region
        $region53: #{tpu_custom_call.1} parent=11 // pred_check
          %p602 = pneg %p336
        $region54: #{tpu_custom_call.1} parent=11 // pred_check_branch
          %604 = sbr.rel (%p602) target = $region56
        $region55: #{tpu_custom_call.1} parent=11 // pred_region
          %s606 = ssub.s32 256, 256
          %607 = vsyncadd [#allocation23], %s606
          %s608 = sshll.u32 [#allocation24], 4
          %s609 = int_to_ptr.vmem [resolvable:$true] %s608
          %614 = dma.hbm_to_vmem [thread:$0]  %s12, 256, %s609, [#allocation23], 64, 64, 4
        $region56: #{tpu_custom_call.1} parent=11 // pred_fallthru
          _
        // Predicated region
        $region57: #{tpu_custom_call.1} parent=11 // pred_check
          %p615 = pneg %p357
        $region58: #{tpu_custom_call.1} parent=11 // pred_check_branch
          %617 = sbr.rel (%p615) target = $region60
        $region59: #{tpu_custom_call.1} parent=11 // pred_region
          %s619 = ssub.s32 16, 16
          %620 = vsyncadd [#allocation26], %s619
          %s622 = sshll.u32 [#allocation25], 4
          %s623 = int_to_ptr.vmem [resolvable:$true] %s622
          %625 = dma.hbm_to_vmem [thread:$0]  %s13, 16, %s623, [#allocation26]
        $region60: #{tpu_custom_call.1} parent=11 // pred_fallthru
          _
        // Predicated region
        $region61: #{tpu_custom_call.1} parent=11 // pred_check
          %p626 = pneg %p378
        $region62: #{tpu_custom_call.1} parent=11 // pred_check_branch
          %628 = sbr.rel (%p626) target = $region64
        $region63: #{tpu_custom_call.1} parent=11 // pred_region
          %s630 = ssub.s32 1024, 1024
          %631 = vsyncadd [#allocation26], %s630
          %s632 = sshll.u32 [#allocation27], 4
          %s633 = int_to_ptr.vmem [resolvable:$true] %s632
          %638 = dma.hbm_to_vmem [thread:$0]  %s14, 1024, %s633, [#allocation26], 64, 64, 4
        $region64: #{tpu_custom_call.1} parent=11 // pred_fallthru
          _
        // Predicated region
        $region65: #{tpu_custom_call.1} parent=11 // pred_check
          %p639 = pneg %p399
        $region66: #{tpu_custom_call.1} parent=11 // pred_check_branch
          %641 = sbr.rel (%p639) target = $region68
        $region67: #{tpu_custom_call.1} parent=11 // pred_region
          %s643 = ssub.s32 16, 16
          %644 = vsyncadd [#allocation29], %s643
          %s646 = sshll.u32 [#allocation28], 4
          %s647 = int_to_ptr.vmem [resolvable:$true] %s646
          %649 = dma.hbm_to_vmem [thread:$0]  %s15, 16, %s647, [#allocation29]
        $region68: #{tpu_custom_call.1} parent=11 // pred_fallthru
          _
        // Predicated region
        $region69: #{tpu_custom_call.1} parent=11 // pred_check
          %p650 = pneg %p420
        $region70: #{tpu_custom_call.1} parent=11 // pred_check_branch
          %652 = sbr.rel (%p650) target = $region72
        $region71: #{tpu_custom_call.1} parent=11 // pred_region
          %s654 = ssub.s32 16, 16
          %655 = vsyncadd [#allocation29], %s654
          %s657 = sshll.u32 [#allocation30], 4
          %s658 = int_to_ptr.vmem [resolvable:$true] %s657
          %660 = dma.hbm_to_vmem [thread:$0]  %s16, 16, %s658, [#allocation29]
        $region72: #{tpu_custom_call.1} parent=11 // pred_fallthru
          _
        // Predicated region
        $region73: #{tpu_custom_call.1} parent=11 // pred_check
          %p661 = pneg %p441
        $region74: #{tpu_custom_call.1} parent=11 // pred_check_branch
          %663 = sbr.rel (%p661) target = $region76
        $region75: #{tpu_custom_call.1} parent=11 // pred_region
          %s665 = ssub.s32 16, 16
          %666 = vsyncadd [#allocation32], %s665
          %s668 = sshll.u32 [#allocation31], 4
          %s669 = int_to_ptr.vmem [resolvable:$true] %s668
          %671 = dma.hbm_to_vmem [thread:$0]  %s17, 16, %s669, [#allocation32]
        $region76: #{tpu_custom_call.1} parent=11 // pred_fallthru
          _
      $region12: #{tpu_custom_call.1} parent=5 // pred_fallthru
        _
      %p672 = scmp.lt.s32.totalorder %s41, 2
      // Predicated region
      $region77: #{tpu_custom_call.1} parent=5 // pred_check
        %p673 = pneg %p672
      $region78: #{tpu_custom_call.1} parent=5 // pred_check_branch
        %675 = sbr.rel (%p673) target = $region80
      $region79: #{tpu_custom_call.1} parent=5 // pred_region
        // Predicated region
        $region81: #{tpu_custom_call.1} parent=79 // pred_check
          %p676 = pneg %p73
        $region82: #{tpu_custom_call.1} parent=79 // pred_check_branch
          %678 = sbr.rel (%p676) target = $region84
        $region83: #{tpu_custom_call.1} parent=79 // pred_region
          %s679 = sand.u32 %s63, 1
          %s680 = scalar_lea.sflag [#allocation5], %s679
          %s681 = sand.u32 %s63, 1
          %s682 = smul.addr %s681, 8
          %s683 = scalar_lea.vmem [#allocation4], %s682
          %s685 = ssub.s32 128, 128
          %686 = vsyncadd %s680, %s685
          %s687 = smul.addr %s48, 128
          %s688 = scalar_lea.hbm %s0, %s687
          %s690 = sshll.u32 %s683, 4
          %s691 = int_to_ptr.vmem [resolvable:$true] %s690
          %693 = dma.hbm_to_vmem [thread:$0]  %s688, 128, %s691, %s680
        $region84: #{tpu_custom_call.1} parent=79 // pred_fallthru
          _
        // Predicated region
        $region85: #{tpu_custom_call.1} parent=79 // pred_check
          %p694 = pneg %p99
        $region86: #{tpu_custom_call.1} parent=79 // pred_check_branch
          %696 = sbr.rel (%p694) target = $region88
        $region87: #{tpu_custom_call.1} parent=79 // pred_region
          %s697 = sand.u32 %s41, 1
          %s698 = scalar_lea.sflag [#allocation8], %s697
          %s699 = sand.u32 %s89, 1
          %s700 = scalar_lea.vmem [#allocation7], %s699
          %s702 = ssub.s32 16, 16
          %703 = vsyncadd %s698, %s702
          %s704 = smul.addr %s48, 16
          %s705 = scalar_lea.hbm %s1, %s704
          %s707 = sshll.u32 %s700, 4
          %s708 = int_to_ptr.vmem [resolvable:$true] %s707
          %710 = dma.hbm_to_vmem [thread:$0]  %s705, 16, %s708, %s698
        $region88: #{tpu_custom_call.1} parent=79 // pred_fallthru
          _
      $region80: #{tpu_custom_call.1} parent=5 // pred_fallthru
        _
      %p711 = scmp.le.s32.totalorder 1, %s41
      %p712 = scmp.lt.s32.totalorder %s41, 3
      %p713 = pnand %p711, %p712
      %p714 = pneg %p713
      // Predicated region
      $region89: #{tpu_custom_call.1} parent=5 // pred_check
        _
      $region90: #{tpu_custom_call.1} parent=5 // pred_check_branch
        %716 = sbr.rel (%p713) target = $region92
      $region91: #{tpu_custom_call.1} parent=5 // pred_region
        %s717 = ssub.s32 %s41, 1
        %s718 = sand.u32 %s66, 1
        %s719 = scalar_lea.sflag [#allocation5], %s718
        %s720 = sand.u32 %s66, 1
        %s721 = smul.addr %s720, 8
        %s722 = scalar_lea.vmem [#allocation4], %s721
        // Predicated region
        $region93: #{tpu_custom_call.1} parent=91 // pred_check
          %p723 = pneg %p79
        $region94: #{tpu_custom_call.1} parent=91 // pred_check_branch
          %725 = sbr.rel (%p723) target = $region96
        $region95: #{tpu_custom_call.1} parent=91 // pred_region
          %726 = dma.done %s719, 128
        $region96: #{tpu_custom_call.1} parent=91 // pred_fallthru
          _
        %s727 = sand.u32 %s46, 1
        %s728 = scalar_lea.sflag [#allocation8], %s727
        %s729 = sand.u32 %s92, 1
        %s730 = scalar_lea.vmem [#allocation7], %s729
        // Predicated region
        $region97: #{tpu_custom_call.1} parent=91 // pred_check
          %p731 = pneg %p105
        $region98: #{tpu_custom_call.1} parent=91 // pred_check_branch
          %733 = sbr.rel (%p731) target = $region100
        $region99: #{tpu_custom_call.1} parent=91 // pred_region
          %734 = dma.done %s728, 16
        $region100: #{tpu_custom_call.1} parent=91 // pred_fallthru
          _
        // Predicated region
        $region101: #{tpu_custom_call.1} parent=91 // pred_check
          %p735 = pneg %p126
        $region102: #{tpu_custom_call.1} parent=91 // pred_check_branch
          %737 = sbr.rel (%p735) target = $region104
        $region103: #{tpu_custom_call.1} parent=91 // pred_region
          %738 = dma.done [#allocation8], 256
        $region104: #{tpu_custom_call.1} parent=91 // pred_fallthru
          _
        // Predicated region
        $region105: #{tpu_custom_call.1} parent=91 // pred_check
          %p739 = pneg %p147
        $region106: #{tpu_custom_call.1} parent=91 // pred_check_branch
          %741 = sbr.rel (%p739) target = $region108
        $region107: #{tpu_custom_call.1} parent=91 // pred_region
          %742 = dma.done [#allocation11], 16
        $region108: #{tpu_custom_call.1} parent=91 // pred_fallthru
          _
        // Predicated region
        $region109: #{tpu_custom_call.1} parent=91 // pred_check
          %p743 = pneg %p168
        $region110: #{tpu_custom_call.1} parent=91 // pred_check_branch
          %745 = sbr.rel (%p743) target = $region112
        $region111: #{tpu_custom_call.1} parent=91 // pred_region
          %746 = dma.done [#allocation11], 256
        $region112: #{tpu_custom_call.1} parent=91 // pred_fallthru
          _
        // Predicated region
        $region113: #{tpu_custom_call.1} parent=91 // pred_check
          %p747 = pneg %p189
        $region114: #{tpu_custom_call.1} parent=91 // pred_check_branch
          %749 = sbr.rel (%p747) target = $region116
        $region115: #{tpu_custom_call.1} parent=91 // pred_region
          %750 = dma.done [#allocation14], 16
        $region116: #{tpu_custom_call.1} parent=91 // pred_fallthru
          _
        // Predicated region
        $region117: #{tpu_custom_call.1} parent=91 // pred_check
          %p751 = pneg %p210
        $region118: #{tpu_custom_call.1} parent=91 // pred_check_branch
          %753 = sbr.rel (%p751) target = $region120
        $region119: #{tpu_custom_call.1} parent=91 // pred_region
          %754 = dma.done [#allocation14], 256
        $region120: #{tpu_custom_call.1} parent=91 // pred_fallthru
          _
        // Predicated region
        $region121: #{tpu_custom_call.1} parent=91 // pred_check
          %p755 = pneg %p231
        $region122: #{tpu_custom_call.1} parent=91 // pred_check_branch
          %757 = sbr.rel (%p755) target = $region124
        $region123: #{tpu_custom_call.1} parent=91 // pred_region
          %758 = dma.done [#allocation17], 16
        $region124: #{tpu_custom_call.1} parent=91 // pred_fallthru
          _
        // Predicated region
        $region125: #{tpu_custom_call.1} parent=91 // pred_check
          %p759 = pneg %p252
        $region126: #{tpu_custom_call.1} parent=91 // pred_check_branch
          %761 = sbr.rel (%p759) target = $region128
        $region127: #{tpu_custom_call.1} parent=91 // pred_region
          %762 = dma.done [#allocation17], 256
        $region128: #{tpu_custom_call.1} parent=91 // pred_fallthru
          _
        // Predicated region
        $region129: #{tpu_custom_call.1} parent=91 // pred_check
          %p763 = pneg %p273
        $region130: #{tpu_custom_call.1} parent=91 // pred_check_branch
          %765 = sbr.rel (%p763) target = $region132
        $region131: #{tpu_custom_call.1} parent=91 // pred_region
          %766 = dma.done [#allocation20], 16
        $region132: #{tpu_custom_call.1} parent=91 // pred_fallthru
          _
        // Predicated region
        $region133: #{tpu_custom_call.1} parent=91 // pred_check
          %p767 = pneg %p294
        $region134: #{tpu_custom_call.1} parent=91 // pred_check_branch
          %769 = sbr.rel (%p767) target = $region136
        $region135: #{tpu_custom_call.1} parent=91 // pred_region
          %770 = dma.done [#allocation20], 16
        $region136: #{tpu_custom_call.1} parent=91 // pred_fallthru
          _
        // Predicated region
        $region137: #{tpu_custom_call.1} parent=91 // pred_check
          %p771 = pneg %p315
        $region138: #{tpu_custom_call.1} parent=91 // pred_check_branch
          %773 = sbr.rel (%p771) target = $region140
        $region139: #{tpu_custom_call.1} parent=91 // pred_region
          %774 = dma.done [#allocation23], 16
        $region140: #{tpu_custom_call.1} parent=91 // pred_fallthru
          _
        // Predicated region
        $region141: #{tpu_custom_call.1} parent=91 // pred_check
          %p775 = pneg %p336
        $region142: #{tpu_custom_call.1} parent=91 // pred_check_branch
          %777 = sbr.rel (%p775) target = $region144
        $region143: #{tpu_custom_call.1} parent=91 // pred_region
          %778 = dma.done [#allocation23], 256
        $region144: #{tpu_custom_call.1} parent=91 // pred_fallthru
          _
        // Predicated region
        $region145: #{tpu_custom_call.1} parent=91 // pred_check
          %p779 = pneg %p357
        $region146: #{tpu_custom_call.1} parent=91 // pred_check_branch
          %781 = sbr.rel (%p779) target = $region148
        $region147: #{tpu_custom_call.1} parent=91 // pred_region
          %782 = dma.done [#allocation26], 16
        $region148: #{tpu_custom_call.1} parent=91 // pred_fallthru
          _
        // Predicated region
        $region149: #{tpu_custom_call.1} parent=91 // pred_check
          %p783 = pneg %p378
        $region150: #{tpu_custom_call.1} parent=91 // pred_check_branch
          %785 = sbr.rel (%p783) target = $region152
        $region151: #{tpu_custom_call.1} parent=91 // pred_region
          %786 = dma.done [#allocation26], 1024
        $region152: #{tpu_custom_call.1} parent=91 // pred_fallthru
          _
        // Predicated region
        $region153: #{tpu_custom_call.1} parent=91 // pred_check
          %p787 = pneg %p399
        $region154: #{tpu_custom_call.1} parent=91 // pred_check_branch
          %789 = sbr.rel (%p787) target = $region156
        $region155: #{tpu_custom_call.1} parent=91 // pred_region
          %790 = dma.done [#allocation29], 16
        $region156: #{tpu_custom_call.1} parent=91 // pred_fallthru
          _
        // Predicated region
        $region157: #{tpu_custom_call.1} parent=91 // pred_check
          %p791 = pneg %p420
        $region158: #{tpu_custom_call.1} parent=91 // pred_check_branch
          %793 = sbr.rel (%p791) target = $region160
        $region159: #{tpu_custom_call.1} parent=91 // pred_region
          %794 = dma.done [#allocation29], 16
        $region160: #{tpu_custom_call.1} parent=91 // pred_fallthru
          _
        // Predicated region
        $region161: #{tpu_custom_call.1} parent=91 // pred_check
          %p795 = pneg %p441
        $region162: #{tpu_custom_call.1} parent=91 // pred_check_branch
          %797 = sbr.rel (%p795) target = $region164
        $region163: #{tpu_custom_call.1} parent=91 // pred_region
          %798 = dma.done [#allocation32], 16
        $region164: #{tpu_custom_call.1} parent=91 // pred_fallthru
          _
        %s799 = sand.u32 %s66, 1
        %s800 = scalar_lea.sflag [#allocation5], %s799
        %s801 = sand.u32 %s66, 1
        %s802 = smul.addr %s801, 8
        %s803 = scalar_lea.vmem [#allocation4], %s802
        %p804 = pneg %p79
        %p805 = pneg %p76
        %s806 = sand.u32 %s46, 1
        %s807 = scalar_lea.sflag [#allocation8], %s806
        %s808 = sand.u32 %s92, 1
        %s809 = scalar_lea.vmem [#allocation7], %s808
        %p810 = pneg %p105
        %p811 = pneg %p102
        %p812 = pneg %p126
        %p813 = pneg %p123
        %p814 = pneg %p147
        %p815 = pneg %p144
        %p816 = pneg %p168
        %p817 = pneg %p165
        %p818 = pneg %p189
        %p819 = pneg %p186
        %p820 = pneg %p210
        %p821 = pneg %p207
        %p822 = pneg %p231
        %p823 = pneg %p228
        %p824 = pneg %p252
        %p825 = pneg %p249
        %p826 = pneg %p273
        %p827 = pneg %p270
        %p828 = pneg %p294
        %p829 = pneg %p291
        %p830 = pneg %p315
        %p831 = pneg %p312
        %p832 = pneg %p336
        %p833 = pneg %p333
        %p834 = pneg %p357
        %p835 = pneg %p354
        %p836 = pneg %p378
        %p837 = pneg %p375
        %p838 = pneg %p399
        %p839 = pneg %p396
        %p840 = pneg %p420
        %p841 = pneg %p417
        %p842 = pneg %p441
        %p843 = pneg %p438
        %p844 = pneg %p469
        %p845 = pneg %p466
        %s846 = sand.u32 %s456, 1
        %s847 = scalar_lea.sflag [#allocation6], %s846
        %s848 = sand.u32 %s456, 1
        %s849 = smul.addr %s848, 8
        %s850 = scalar_lea.vmem [#allocation33], %s849
        %p852 = scmp.eq.s32.totalorder %s51, 0
        // Predicated region
        $region165: #{tpu_custom_call.1} parent=91 // pred_check
          %p853 = pneg %p852
        $region166: #{tpu_custom_call.1} parent=91 // pred_check_branch
          %855 = sbr.rel (%p853) target = $region168
        $region167: #{tpu_custom_call.1} parent=91 // pred_region
          %v856 = vld [vmem:[%s722] sm:$0xff]
          %v857 = vpack.c.bf16 %v856, %v856
          %v858 = vld [vmem:[#allocation12] sm:$0xf]
          %v859 = vld [vmem:[#allocation12 + $0x4] sm:$0xf]
          %v860 = vld [vmem:[#allocation12 + $0x8] sm:$0xf]
          %v861 = vld [vmem:[#allocation12 + $0xc] sm:$0xf]
          %v862 = vld [vmem:[#allocation13] sm:$0x1]
          %v864 = vlaneseq
          %v865 = vshrl.u32 %v864, 7
          %v866 = vsub.s32 0, %v865
          %v867 = vrot.slane %v862, %v866
          %v873 = vunpack.c.l.b16 %v858
          %v874 = vunpack.c.l.b16 %v859
          %v875 = vunpack.c.l.b16 %v860
          %v876 = vunpack.c.l.b16 %v861
          %v877 = vpack.c.b16 %v874, %v873
          %v878 = vpack.c.b16 %v876, %v875
          %vm881 = vcmask 261120
          %v883 = vsel %vm881, %v857, 0
          %885 = vmatprep.subr.bf16.mxu0 0
          %886 = vmatpush1.bf16.msra.mxu0 %v877
          %887 = vmatprep.subr.bf16.mxu0 0
          %888 = vmatpush1.bf16.msra.mxu0 %v878
          %889 = vmatprep.subr.bf16.mxu0 0
          %890 = vmatpush1.bf16.msra.mxu0 0
          %891 = vmatprep.subr.bf16.mxu0 0
          %892 = vmatpush1.bf16.msra.mxu0 0
          %893 = vmatprep.subr.bf16.mxu0 0
          %894 = vmatpush1.bf16.msra.mxu0 0
          %895 = vmatprep.subr.bf16.mxu0 0
          %896 = vmatpush1.bf16.msra.mxu0 0
          %897 = vmatprep.subr.bf16.mxu0 0
          %898 = vmatpush1.bf16.msra.mxu0 0
          %899 = vmatprep.subr.bf16.mxu0 0
          %900 = vmatpush1.bf16.msra.mxu0 0
          %901 = vmatprep.subr.bf16.mxu0 0
          %902 = vmatpush1.bf16.msra.mxu0 0
          %903 = vmatprep.subr.bf16.mxu0 0
          %904 = vmatpush1.bf16.msra.mxu0 0
          %905 = vmatprep.subr.bf16.mxu0 0
          %906 = vmatpush1.bf16.msra.mxu0 0
          %907 = vmatprep.subr.bf16.mxu0 0
          %908 = vmatpush1.bf16.msra.mxu0 0
          %909 = vmatprep.subr.bf16.mxu0 0
          %910 = vmatpush1.bf16.msra.mxu0 0
          %911 = vmatprep.subr.bf16.mxu0 0
          %912 = vmatpush1.bf16.msra.mxu0 0
          %913 = vmatprep.subr.bf16.mxu0 0
          %914 = vmatpush1.bf16.msra.mxu0 0
          %915 = vmatprep.subr.bf16.mxu0 0
          %916 = vmatpush1.bf16.msra.mxu0 0
          %917 = vmatprep.mubr.bf16.mxu0 0
          %918 = vmatmul.mubr.bf16.gmra.mrb[0].mxu0 %v883
          %v919 = vpop.f32.mrb[0].mxu0
          %v920 = vadd.f32 %v867, %v919
          %v921 = vpop.f32.mrb[0].mxu0
          %v922 = vpop.f32.mrb[0].mxu0
          %v923 = vpop.f32.mrb[0].mxu0
          %924 = vdwg.mxu0
          %v925 = vld [vmem:[#allocation15] sm:$0xf]
          %v926 = vld [vmem:[#allocation15 + $0x4] sm:$0xf]
          %v927 = vld [vmem:[#allocation15 + $0x8] sm:$0xf]
          %v928 = vld [vmem:[#allocation15 + $0xc] sm:$0xf]
          %v929 = vld [vmem:[#allocation16] sm:$0x1]
          %v931 = vlaneseq
          %v932 = vshrl.u32 %v931, 7
          %v933 = vsub.s32 0, %v932
          %v934 = vrot.slane %v929, %v933
          %v940 = vunpack.c.l.b16 %v925
          %v941 = vunpack.c.l.b16 %v926
          %v942 = vunpack.c.l.b16 %v927
          %v943 = vunpack.c.l.b16 %v928
          %v944 = vpack.c.b16 %v941, %v940
          %v945 = vpack.c.b16 %v943, %v942
          %948 = vmatprep.subr.bf16.mxu0 0
          %949 = vmatpush1.bf16.msra.mxu0 %v944
          %950 = vmatprep.subr.bf16.mxu0 0
          %951 = vmatpush1.bf16.msra.mxu0 %v945
          %952 = vmatprep.subr.bf16.mxu0 0
          %953 = vmatpush1.bf16.msra.mxu0 0
          %954 = vmatprep.subr.bf16.mxu0 0
          %955 = vmatpush1.bf16.msra.mxu0 0
          %956 = vmatprep.subr.bf16.mxu0 0
          %957 = vmatpush1.bf16.msra.mxu0 0
          %958 = vmatprep.subr.bf16.mxu0 0
          %959 = vmatpush1.bf16.msra.mxu0 0
          %960 = vmatprep.subr.bf16.mxu0 0
          %961 = vmatpush1.bf16.msra.mxu0 0
          %962 = vmatprep.subr.bf16.mxu0 0
          %963 = vmatpush1.bf16.msra.mxu0 0
          %964 = vmatprep.subr.bf16.mxu0 0
          %965 = vmatpush1.bf16.msra.mxu0 0
          %966 = vmatprep.subr.bf16.mxu0 0
          %967 = vmatpush1.bf16.msra.mxu0 0
          %968 = vmatprep.subr.bf16.mxu0 0
          %969 = vmatpush1.bf16.msra.mxu0 0
          %970 = vmatprep.subr.bf16.mxu0 0
          %971 = vmatpush1.bf16.msra.mxu0 0
          %972 = vmatprep.subr.bf16.mxu0 0
          %973 = vmatpush1.bf16.msra.mxu0 0
          %974 = vmatprep.subr.bf16.mxu0 0
          %975 = vmatpush1.bf16.msra.mxu0 0
          %976 = vmatprep.subr.bf16.mxu0 0
          %977 = vmatpush1.bf16.msra.mxu0 0
          %978 = vmatprep.subr.bf16.mxu0 0
          %979 = vmatpush1.bf16.msra.mxu0 0
          %980 = vmatprep.mubr.bf16.mxu0 0
          %981 = vmatmul.mubr.bf16.gmra.mrb[0].mxu0 %v883
          %v982 = vpop.f32.mrb[0].mxu0
          %v983 = vadd.f32 %v934, %v982
          %v984 = vpop.f32.mrb[0].mxu0
          %v985 = vpop.f32.mrb[0].mxu0
          %v986 = vpop.f32.mrb[0].mxu0
          %987 = vdwg.mxu0
          %v988 = vpack.c.bf16 %v920, %v920
          %990 = vrot.lane.b32.xlu0 %v988, 120
          %v991 = vpop.permute.xlu0 %990
          %992 = vrot.lane.b32.xlu0 %v988, 112
          %v993 = vpop.permute.xlu0 %992
          %994 = vrot.lane.b32.xlu0 %v988, 104
          %v995 = vpop.permute.xlu0 %994
          %v997 = vunpack.c.l.s4 1983009808
          %v998 = vunpack.c.0.s8 %v997
          %v999 = vlaneseq
          %v1000 = vshrl.u32 %v999, 7
          %v1001 = vsub.s32 %v998, %v1000
          %v1002 = vrot.slane %v988, %v1001
          %v1005 = vunpack.c.l.s4 1983009808
          %v1006 = vunpack.c.0.s8 %v1005
          %v1007 = vlaneseq
          %v1008 = vshrl.u32 %v1007, 7
          %v1009 = vsub.s32 %v1006, %v1008
          %v1010 = vrot.slane %v993, %v1009
          %v1011 = vcombine.low %v1002, %v1010
          %v1012 = vcombine.high %v1002, %v1010
          %v1014 = vunpack.c.l.s4 1934713408
          %v1015 = vunpack.c.0.s8 %v1014
          %v1016 = vlaneseq
          %v1017 = vshrl.u32 %v1016, 7
          %v1018 = vsub.s32 %v1015, %v1017
          %v1019 = vrot.slane %v1011, %v1018
          %v1021 = vunpack.c.l.s4 1934713408
          %v1022 = vunpack.c.0.s8 %v1021
          %v1023 = vlaneseq
          %v1024 = vshrl.u32 %v1023, 7
          %v1025 = vsub.s32 %v1022, %v1024
          %v1026 = vrot.slane %v1012, %v1025
          %v1027 = vcombine.high %v1019, 0
          %v1028 = vcombine.high %v1026, 0
          %v1031 = vunpack.c.l.s4 1983009808
          %v1032 = vunpack.c.0.s8 %v1031
          %v1033 = vlaneseq
          %v1034 = vshrl.u32 %v1033, 7
          %v1035 = vsub.s32 %v1032, %v1034
          %v1036 = vrot.slane %v991, %v1035
          %v1039 = vunpack.c.l.s4 1983009808
          %v1040 = vunpack.c.0.s8 %v1039
          %v1041 = vlaneseq
          %v1042 = vshrl.u32 %v1041, 7
          %v1043 = vsub.s32 %v1040, %v1042
          %v1044 = vrot.slane %v995, %v1043
          %v1045 = vcombine.low %v1036, %v1044
          %v1046 = vcombine.high %v1036, %v1044
          %v1048 = vunpack.c.l.s4 1934713408
          %v1049 = vunpack.c.0.s8 %v1048
          %v1050 = vlaneseq
          %v1051 = vshrl.u32 %v1050, 7
          %v1052 = vsub.s32 %v1049, %v1051
          %v1053 = vrot.slane %v1045, %v1052
          %v1055 = vunpack.c.l.s4 1934713408
          %v1056 = vunpack.c.0.s8 %v1055
          %v1057 = vlaneseq
          %v1058 = vshrl.u32 %v1057, 7
          %v1059 = vsub.s32 %v1056, %v1058
          %v1060 = vrot.slane %v1046, %v1059
          %v1061 = vcombine.high %v1053, 0
          %v1062 = vcombine.high %v1060, 0
          %v1065 = vpack.i.b16 %v1053, %v1019
          %v1067 = vshrl.u32 %v1019, 16
          %v1068 = vshrl.u32 %v1053, 16
          %v1069 = vpack.i.b16 %v1068, %v1067
          %v1073 = vpack.i.b16 %v1061, %v1027
          %v1075 = vshrl.u32 %v1027, 16
          %v1076 = vshrl.u32 %v1061, 16
          %v1077 = vpack.i.b16 %v1076, %v1075
          %v1081 = vpack.i.b16 %v1060, %v1026
          %v1083 = vshrl.u32 %v1026, 16
          %v1084 = vshrl.u32 %v1060, 16
          %v1085 = vpack.i.b16 %v1084, %v1083
          %v1089 = vpack.i.b16 %v1062, %v1028
          %v1091 = vshrl.u32 %v1028, 16
          %v1092 = vshrl.u32 %v1062, 16
          %v1093 = vpack.i.b16 %v1092, %v1091
          %v1095 = vcombine.low %v1065, %v1081
          %v1097 = vunpack.c.l.s4 1983009808
          %v1098 = vunpack.c.0.s8 %v1097
          %v1099 = vlaneseq
          %v1100 = vshrl.u32 %v1099, 7
          %v1101 = vsub.s32 %v1098, %v1100
          %v1102 = vrot.slane %v1095, %v1101
          %v1103 = vcombine.low %v1073, %v1089
          %v1105 = vunpack.c.l.s4 1983009808
          %v1106 = vunpack.c.0.s8 %v1105
          %v1107 = vlaneseq
          %v1108 = vshrl.u32 %v1107, 7
          %v1109 = vsub.s32 %v1106, %v1108
          %v1110 = vrot.slane %v1103, %v1109
          %v1111 = vcombine.low %v1102, %v1110
          %v1113 = vunpack.c.l.s4 1934713408
          %v1114 = vunpack.c.0.s8 %v1113
          %v1115 = vlaneseq
          %v1116 = vshrl.u32 %v1115, 7
          %v1117 = vsub.s32 %v1114, %v1116
          %v1118 = vrot.slane %v1111, %v1117
          %v1119 = vcombine.high %v1118, 0
          %v1120 = vcombine.low %v1069, %v1085
          %v1122 = vunpack.c.l.s4 1983009808
          %v1123 = vunpack.c.0.s8 %v1122
          %v1124 = vlaneseq
          %v1125 = vshrl.u32 %v1124, 7
          %v1126 = vsub.s32 %v1123, %v1125
          %v1127 = vrot.slane %v1120, %v1126
          %v1128 = vcombine.low %v1077, %v1093
          %v1130 = vunpack.c.l.s4 1983009808
          %v1131 = vunpack.c.0.s8 %v1130
          %v1132 = vlaneseq
          %v1133 = vshrl.u32 %v1132, 7
          %v1134 = vsub.s32 %v1131, %v1133
          %v1135 = vrot.slane %v1128, %v1134
          %v1136 = vcombine.low %v1127, %v1135
          %v1138 = vunpack.c.l.s4 1934713408
          %v1139 = vunpack.c.0.s8 %v1138
          %v1140 = vlaneseq
          %v1141 = vshrl.u32 %v1140, 7
          %v1142 = vsub.s32 %v1139, %v1141
          %v1143 = vrot.slane %v1136, %v1142
          %v1144 = vcombine.high %v1143, 0
          %v1147 = vpack.i.b16 %v1143, %v1118
          %v1149 = vshrl.u32 %v1118, 16
          %v1150 = vshrl.u32 %v1143, 16
          %v1151 = vpack.i.b16 %v1150, %v1149
          %v1155 = vpack.i.b16 %v1144, %v1119
          %v1157 = vshrl.u32 %v1119, 16
          %v1158 = vshrl.u32 %v1144, 16
          %v1159 = vpack.i.b16 %v1158, %v1157
          %vm1161 = vcmask 60416
          %1162 = vst.msk [vmem:[#allocation2] sm:$0xf] %vm1161, %v1147
          %1163 = vst.msk [vmem:[#allocation2 + $0x4] sm:$0xf] %vm1161, %v1151
          %1164 = vst.msk [vmem:[#allocation2 + $0x8] sm:$0xf] %vm1161, %v1155
          %1165 = vst.msk [vmem:[#allocation2 + $0xc] sm:$0xf] %vm1161, %v1159
          %v1166 = vpack.c.bf16 %v983, %v983
          %1168 = vrot.lane.b32.xlu0 %v1166, 120
          %v1169 = vpop.permute.xlu0 %1168
          %1170 = vrot.lane.b32.xlu0 %v1166, 112
          %v1171 = vpop.permute.xlu0 %1170
          %1172 = vrot.lane.b32.xlu0 %v1166, 104
          %v1173 = vpop.permute.xlu0 %1172
          %v1175 = vunpack.c.l.s4 1983009808
          %v1176 = vunpack.c.0.s8 %v1175
          %v1177 = vlaneseq
          %v1178 = vshrl.u32 %v1177, 7
          %v1179 = vsub.s32 %v1176, %v1178
          %v1180 = vrot.slane %v1166, %v1179
          %v1183 = vunpack.c.l.s4 1983009808
          %v1184 = vunpack.c.0.s8 %v1183
          %v1185 = vlaneseq
          %v1186 = vshrl.u32 %v1185, 7
          %v1187 = vsub.s32 %v1184, %v1186
          %v1188 = vrot.slane %v1171, %v1187
          %v1189 = vcombine.low %v1180, %v1188
          %v1190 = vcombine.high %v1180, %v1188
          %v1192 = vunpack.c.l.s4 1934713408
          %v1193 = vunpack.c.0.s8 %v1192
          %v1194 = vlaneseq
          %v1195 = vshrl.u32 %v1194, 7
          %v1196 = vsub.s32 %v1193, %v1195
          %v1197 = vrot.slane %v1189, %v1196
          %v1199 = vunpack.c.l.s4 1934713408
          %v1200 = vunpack.c.0.s8 %v1199
          %v1201 = vlaneseq
          %v1202 = vshrl.u32 %v1201, 7
          %v1203 = vsub.s32 %v1200, %v1202
          %v1204 = vrot.slane %v1190, %v1203
          %v1205 = vcombine.high %v1197, 0
          %v1206 = vcombine.high %v1204, 0
          %v1209 = vunpack.c.l.s4 1983009808
          %v1210 = vunpack.c.0.s8 %v1209
          %v1211 = vlaneseq
          %v1212 = vshrl.u32 %v1211, 7
          %v1213 = vsub.s32 %v1210, %v1212
          %v1214 = vrot.slane %v1169, %v1213
          %v1217 = vunpack.c.l.s4 1983009808
          %v1218 = vunpack.c.0.s8 %v1217
          %v1219 = vlaneseq
          %v1220 = vshrl.u32 %v1219, 7
          %v1221 = vsub.s32 %v1218, %v1220
          %v1222 = vrot.slane %v1173, %v1221
          %v1223 = vcombine.low %v1214, %v1222
          %v1224 = vcombine.high %v1214, %v1222
          %v1226 = vunpack.c.l.s4 1934713408
          %v1227 = vunpack.c.0.s8 %v1226
          %v1228 = vlaneseq
          %v1229 = vshrl.u32 %v1228, 7
          %v1230 = vsub.s32 %v1227, %v1229
          %v1231 = vrot.slane %v1223, %v1230
          %v1233 = vunpack.c.l.s4 1934713408
          %v1234 = vunpack.c.0.s8 %v1233
          %v1235 = vlaneseq
          %v1236 = vshrl.u32 %v1235, 7
          %v1237 = vsub.s32 %v1234, %v1236
          %v1238 = vrot.slane %v1224, %v1237
          %v1239 = vcombine.high %v1231, 0
          %v1240 = vcombine.high %v1238, 0
          %v1243 = vpack.i.b16 %v1231, %v1197
          %v1245 = vshrl.u32 %v1197, 16
          %v1246 = vshrl.u32 %v1231, 16
          %v1247 = vpack.i.b16 %v1246, %v1245
          %v1251 = vpack.i.b16 %v1239, %v1205
          %v1253 = vshrl.u32 %v1205, 16
          %v1254 = vshrl.u32 %v1239, 16
          %v1255 = vpack.i.b16 %v1254, %v1253
          %v1259 = vpack.i.b16 %v1238, %v1204
          %v1261 = vshrl.u32 %v1204, 16
          %v1262 = vshrl.u32 %v1238, 16
          %v1263 = vpack.i.b16 %v1262, %v1261
          %v1267 = vpack.i.b16 %v1240, %v1206
          %v1269 = vshrl.u32 %v1206, 16
          %v1270 = vshrl.u32 %v1240, 16
          %v1271 = vpack.i.b16 %v1270, %v1269
          %v1273 = vcombine.low %v1243, %v1259
          %v1275 = vunpack.c.l.s4 1983009808
          %v1276 = vunpack.c.0.s8 %v1275
          %v1277 = vlaneseq
          %v1278 = vshrl.u32 %v1277, 7
          %v1279 = vsub.s32 %v1276, %v1278
          %v1280 = vrot.slane %v1273, %v1279
          %v1281 = vcombine.low %v1251, %v1267
          %v1283 = vunpack.c.l.s4 1983009808
          %v1284 = vunpack.c.0.s8 %v1283
          %v1285 = vlaneseq
          %v1286 = vshrl.u32 %v1285, 7
          %v1287 = vsub.s32 %v1284, %v1286
          %v1288 = vrot.slane %v1281, %v1287
          %v1289 = vcombine.low %v1280, %v1288
          %v1291 = vunpack.c.l.s4 1934713408
          %v1292 = vunpack.c.0.s8 %v1291
          %v1293 = vlaneseq
          %v1294 = vshrl.u32 %v1293, 7
          %v1295 = vsub.s32 %v1292, %v1294
          %v1296 = vrot.slane %v1289, %v1295
          %v1297 = vcombine.high %v1296, 0
          %v1298 = vcombine.low %v1247, %v1263
          %v1300 = vunpack.c.l.s4 1983009808
          %v1301 = vunpack.c.0.s8 %v1300
          %v1302 = vlaneseq
          %v1303 = vshrl.u32 %v1302, 7
          %v1304 = vsub.s32 %v1301, %v1303
          %v1305 = vrot.slane %v1298, %v1304
          %v1306 = vcombine.low %v1255, %v1271
          %v1308 = vunpack.c.l.s4 1983009808
          %v1309 = vunpack.c.0.s8 %v1308
          %v1310 = vlaneseq
          %v1311 = vshrl.u32 %v1310, 7
          %v1312 = vsub.s32 %v1309, %v1311
          %v1313 = vrot.slane %v1306, %v1312
          %v1314 = vcombine.low %v1305, %v1313
          %v1316 = vunpack.c.l.s4 1934713408
          %v1317 = vunpack.c.0.s8 %v1316
          %v1318 = vlaneseq
          %v1319 = vshrl.u32 %v1318, 7
          %v1320 = vsub.s32 %v1317, %v1319
          %v1321 = vrot.slane %v1314, %v1320
          %v1322 = vcombine.high %v1321, 0
          %v1325 = vpack.i.b16 %v1321, %v1296
          %v1327 = vshrl.u32 %v1296, 16
          %v1328 = vshrl.u32 %v1321, 16
          %v1329 = vpack.i.b16 %v1328, %v1327
          %v1333 = vpack.i.b16 %v1322, %v1297
          %v1335 = vshrl.u32 %v1297, 16
          %v1336 = vshrl.u32 %v1322, 16
          %v1337 = vpack.i.b16 %v1336, %v1335
          %1339 = vst.msk [vmem:[#allocation3] sm:$0xf] %vm1161, %v1325
          %1340 = vst.msk [vmem:[#allocation3 + $0x4] sm:$0xf] %vm1161, %v1329
          %1341 = vst.msk [vmem:[#allocation3 + $0x8] sm:$0xf] %vm1161, %v1333
          %1342 = vst.msk [vmem:[#allocation3 + $0xc] sm:$0xf] %vm1161, %v1337
        $region168: #{tpu_custom_call.1} parent=91 // pred_fallthru
          _
        %s1343 = smul.u32 %s51, 8
        %s1344 = scalar_lea.vmem %s722, %s1343 [#allocation4]
        %v1345 = vld [vmem:[%s1344] sm:$0xff]
        %v1346 = vpack.c.bf16 %v1345, %v1345
        %v1347 = vld [vmem:[#allocation9] sm:$0xf]
        %v1348 = vld [vmem:[#allocation9 + $0x4] sm:$0xf]
        %v1349 = vld [vmem:[#allocation9 + $0x8] sm:$0xf]
        %v1350 = vld [vmem:[#allocation9 + $0xc] sm:$0xf]
        %v1351 = vld [vmem:[#allocation10] sm:$0x1]
        %v1353 = vlaneseq
        %v1354 = vshrl.u32 %v1353, 7
        %v1355 = vsub.s32 0, %v1354
        %v1356 = vrot.slane %v1351, %v1355
        %v1362 = vunpack.c.l.b16 %v1347
        %v1363 = vunpack.c.l.b16 %v1348
        %v1364 = vunpack.c.l.b16 %v1349
        %v1365 = vunpack.c.l.b16 %v1350
        %v1366 = vpack.c.b16 %v1363, %v1362
        %v1367 = vpack.c.b16 %v1365, %v1364
        %vm1370 = vcmask 261120
        %v1372 = vsel %vm1370, %v1346, 0
        %1374 = vmatprep.subr.bf16.mxu0 0
        %1375 = vmatpush1.bf16.msra.mxu0 %v1366
        %1376 = vmatprep.subr.bf16.mxu0 0
        %1377 = vmatpush1.bf16.msra.mxu0 %v1367
        %1378 = vmatprep.subr.bf16.mxu0 0
        %1379 = vmatpush1.bf16.msra.mxu0 0
        %1380 = vmatprep.subr.bf16.mxu0 0
        %1381 = vmatpush1.bf16.msra.mxu0 0
        %1382 = vmatprep.subr.bf16.mxu0 0
        %1383 = vmatpush1.bf16.msra.mxu0 0
        %1384 = vmatprep.subr.bf16.mxu0 0
        %1385 = vmatpush1.bf16.msra.mxu0 0
        %1386 = vmatprep.subr.bf16.mxu0 0
        %1387 = vmatpush1.bf16.msra.mxu0 0
        %1388 = vmatprep.subr.bf16.mxu0 0
        %1389 = vmatpush1.bf16.msra.mxu0 0
        %1390 = vmatprep.subr.bf16.mxu0 0
        %1391 = vmatpush1.bf16.msra.mxu0 0
        %1392 = vmatprep.subr.bf16.mxu0 0
        %1393 = vmatpush1.bf16.msra.mxu0 0
        %1394 = vmatprep.subr.bf16.mxu0 0
        %1395 = vmatpush1.bf16.msra.mxu0 0
        %1396 = vmatprep.subr.bf16.mxu0 0
        %1397 = vmatpush1.bf16.msra.mxu0 0
        %1398 = vmatprep.subr.bf16.mxu0 0
        %1399 = vmatpush1.bf16.msra.mxu0 0
        %1400 = vmatprep.subr.bf16.mxu0 0
        %1401 = vmatpush1.bf16.msra.mxu0 0
        %1402 = vmatprep.subr.bf16.mxu0 0
        %1403 = vmatpush1.bf16.msra.mxu0 0
        %1404 = vmatprep.subr.bf16.mxu0 0
        %1405 = vmatpush1.bf16.msra.mxu0 0
        %1406 = vmatprep.mubr.bf16.mxu0 0
        %1407 = vmatmul.mubr.bf16.gmra.mrb[0].mxu0 %v1372
        %v1408 = vpop.f32.mrb[0].mxu0
        %v1409 = vadd.f32 %v1356, %v1408
        %v1410 = vpop.f32.mrb[0].mxu0
        %v1411 = vpop.f32.mrb[0].mxu0
        %v1412 = vpop.f32.mrb[0].mxu0
        %1413 = vdwg.mxu0
        %v1414 = vpack.c.bf16 %v1409, %v1409
        %1416 = vrot.lane.b32.xlu0 %v1414, 120
        %v1417 = vpop.permute.xlu0 %1416
        %1418 = vrot.lane.b32.xlu0 %v1414, 112
        %v1419 = vpop.permute.xlu0 %1418
        %1420 = vrot.lane.b32.xlu0 %v1414, 104
        %v1421 = vpop.permute.xlu0 %1420
        %v1423 = vunpack.c.l.s4 1983009808
        %v1424 = vunpack.c.0.s8 %v1423
        %v1425 = vlaneseq
        %v1426 = vshrl.u32 %v1425, 7
        %v1427 = vsub.s32 %v1424, %v1426
        %v1428 = vrot.slane %v1414, %v1427
        %v1431 = vunpack.c.l.s4 1983009808
        %v1432 = vunpack.c.0.s8 %v1431
        %v1433 = vlaneseq
        %v1434 = vshrl.u32 %v1433, 7
        %v1435 = vsub.s32 %v1432, %v1434
        %v1436 = vrot.slane %v1419, %v1435
        %v1437 = vcombine.low %v1428, %v1436
        %v1438 = vcombine.high %v1428, %v1436
        %v1440 = vunpack.c.l.s4 1934713408
        %v1441 = vunpack.c.0.s8 %v1440
        %v1442 = vlaneseq
        %v1443 = vshrl.u32 %v1442, 7
        %v1444 = vsub.s32 %v1441, %v1443
        %v1445 = vrot.slane %v1437, %v1444
        %v1447 = vunpack.c.l.s4 1934713408
        %v1448 = vunpack.c.0.s8 %v1447
        %v1449 = vlaneseq
        %v1450 = vshrl.u32 %v1449, 7
        %v1451 = vsub.s32 %v1448, %v1450
        %v1452 = vrot.slane %v1438, %v1451
        %v1453 = vcombine.high %v1445, 0
        %v1454 = vcombine.high %v1452, 0
        %v1457 = vunpack.c.l.s4 1983009808
        %v1458 = vunpack.c.0.s8 %v1457
        %v1459 = vlaneseq
        %v1460 = vshrl.u32 %v1459, 7
        %v1461 = vsub.s32 %v1458, %v1460
        %v1462 = vrot.slane %v1417, %v1461
        %v1465 = vunpack.c.l.s4 1983009808
        %v1466 = vunpack.c.0.s8 %v1465
        %v1467 = vlaneseq
        %v1468 = vshrl.u32 %v1467, 7
        %v1469 = vsub.s32 %v1466, %v1468
        %v1470 = vrot.slane %v1421, %v1469
        %v1471 = vcombine.low %v1462, %v1470
        %v1472 = vcombine.high %v1462, %v1470
        %v1474 = vunpack.c.l.s4 1934713408
        %v1475 = vunpack.c.0.s8 %v1474
        %v1476 = vlaneseq
        %v1477 = vshrl.u32 %v1476, 7
        %v1478 = vsub.s32 %v1475, %v1477
        %v1479 = vrot.slane %v1471, %v1478
        %v1481 = vunpack.c.l.s4 1934713408
        %v1482 = vunpack.c.0.s8 %v1481
        %v1483 = vlaneseq
        %v1484 = vshrl.u32 %v1483, 7
        %v1485 = vsub.s32 %v1482, %v1484
        %v1486 = vrot.slane %v1472, %v1485
        %v1487 = vcombine.high %v1479, 0
        %v1488 = vcombine.high %v1486, 0
        %v1491 = vpack.i.b16 %v1479, %v1445
        %v1493 = vshrl.u32 %v1445, 16
        %v1494 = vshrl.u32 %v1479, 16
        %v1495 = vpack.i.b16 %v1494, %v1493
        %v1499 = vpack.i.b16 %v1487, %v1453
        %v1501 = vshrl.u32 %v1453, 16
        %v1502 = vshrl.u32 %v1487, 16
        %v1503 = vpack.i.b16 %v1502, %v1501
        %v1507 = vpack.i.b16 %v1486, %v1452
        %v1509 = vshrl.u32 %v1452, 16
        %v1510 = vshrl.u32 %v1486, 16
        %v1511 = vpack.i.b16 %v1510, %v1509
        %v1515 = vpack.i.b16 %v1488, %v1454
        %v1517 = vshrl.u32 %v1454, 16
        %v1518 = vshrl.u32 %v1488, 16
        %v1519 = vpack.i.b16 %v1518, %v1517
        %v1521 = vcombine.low %v1491, %v1507
        %v1523 = vunpack.c.l.s4 1983009808
        %v1524 = vunpack.c.0.s8 %v1523
        %v1525 = vlaneseq
        %v1526 = vshrl.u32 %v1525, 7
        %v1527 = vsub.s32 %v1524, %v1526
        %v1528 = vrot.slane %v1521, %v1527
        %v1529 = vcombine.low %v1499, %v1515
        %v1531 = vunpack.c.l.s4 1983009808
        %v1532 = vunpack.c.0.s8 %v1531
        %v1533 = vlaneseq
        %v1534 = vshrl.u32 %v1533, 7
        %v1535 = vsub.s32 %v1532, %v1534
        %v1536 = vrot.slane %v1529, %v1535
        %v1537 = vcombine.low %v1528, %v1536
        %v1539 = vunpack.c.l.s4 1934713408
        %v1540 = vunpack.c.0.s8 %v1539
        %v1541 = vlaneseq
        %v1542 = vshrl.u32 %v1541, 7
        %v1543 = vsub.s32 %v1540, %v1542
        %v1544 = vrot.slane %v1537, %v1543
        %v1545 = vcombine.high %v1544, 0
        %v1546 = vcombine.low %v1495, %v1511
        %v1548 = vunpack.c.l.s4 1983009808
        %v1549 = vunpack.c.0.s8 %v1548
        %v1550 = vlaneseq
        %v1551 = vshrl.u32 %v1550, 7
        %v1552 = vsub.s32 %v1549, %v1551
        %v1553 = vrot.slane %v1546, %v1552
        %v1554 = vcombine.low %v1503, %v1519
        %v1556 = vunpack.c.l.s4 1983009808
        %v1557 = vunpack.c.0.s8 %v1556
        %v1558 = vlaneseq
        %v1559 = vshrl.u32 %v1558, 7
        %v1560 = vsub.s32 %v1557, %v1559
        %v1561 = vrot.slane %v1554, %v1560
        %v1562 = vcombine.low %v1553, %v1561
        %v1564 = vunpack.c.l.s4 1934713408
        %v1565 = vunpack.c.0.s8 %v1564
        %v1566 = vlaneseq
        %v1567 = vshrl.u32 %v1566, 7
        %v1568 = vsub.s32 %v1565, %v1567
        %v1569 = vrot.slane %v1562, %v1568
        %v1570 = vcombine.high %v1569, 0
        %v1573 = vpack.i.b16 %v1569, %v1544
        %v1574 = vshrl.u32 %v1544, 16
        %v1575 = vshrl.u32 %v1569, 16
        %v1576 = vpack.i.b16 %v1575, %v1574
        %v1579 = vpack.i.b16 %v1570, %v1545
        %v1580 = vshrl.u32 %v1545, 16
        %v1581 = vshrl.u32 %v1570, 16
        %v1582 = vpack.i.b16 %v1581, %v1580
        %v1583 = vld [vmem:[#allocation2] sm:$0xf]
        %v1584 = vld [vmem:[#allocation2 + $0x4] sm:$0xf]
        %v1585 = vld [vmem:[#allocation2 + $0x8] sm:$0xf]
        %v1586 = vld [vmem:[#allocation2 + $0xc] sm:$0xf]
        %v1587 = vld [vmem:[%s730] sm:$0x1]
        %v1589 = vlaneseq
        %v1590 = vshrl.u32 %v1589, 7
        %v1591 = vsub.s32 0, %v1590
        %v1592 = vrot.slane %v1587, %v1591
        %vm1594 = vcmask 64512
        %v1596 = vsel %vm1594, %v1573, 0
        %v1599 = vsel %vm1594, %v1583, 0
        %1601 = vmatprep.subr.bf16.mxu0 0
        %1602 = vmatpush1.bf16.xpose.msra.mxu0 %v1599
        %1603 = vmatprep.subr.bf16.mxu0 0
        %1604 = vmatpush1.bf16.xpose.msra.mxu0 0
        %1605 = vmatprep.subr.bf16.mxu0 0
        %1606 = vmatpush1.bf16.xpose.msra.mxu0 0
        %1607 = vmatprep.subr.bf16.mxu0 0
        %1608 = vmatpush1.bf16.xpose.msra.mxu0 0
        %1609 = vmatprep.subr.bf16.mxu0 0
        %1610 = vmatpush1.bf16.xpose.msra.mxu0 0
        %1611 = vmatprep.subr.bf16.mxu0 0
        %1612 = vmatpush1.bf16.xpose.msra.mxu0 0
        %1613 = vmatprep.subr.bf16.mxu0 0
        %1614 = vmatpush1.bf16.xpose.msra.mxu0 0
        %1615 = vmatprep.subr.bf16.mxu0 0
        %1616 = vmatpush1.bf16.xpose.msra.mxu0 0
        %1617 = vmatprep.subr.bf16.mxu0 0
        %1618 = vmatpush1.bf16.xpose.msra.mxu0 0
        %1619 = vmatprep.subr.bf16.mxu0 0
        %1620 = vmatpush1.bf16.xpose.msra.mxu0 0
        %1621 = vmatprep.subr.bf16.mxu0 0
        %1622 = vmatpush1.bf16.xpose.msra.mxu0 0
        %1623 = vmatprep.subr.bf16.mxu0 0
        %1624 = vmatpush1.bf16.xpose.msra.mxu0 0
        %1625 = vmatprep.subr.bf16.mxu0 0
        %1626 = vmatpush1.bf16.xpose.msra.mxu0 0
        %1627 = vmatprep.subr.bf16.mxu0 0
        %1628 = vmatpush1.bf16.xpose.msra.mxu0 0
        %1629 = vmatprep.subr.bf16.mxu0 0
        %1630 = vmatpush1.bf16.xpose.msra.mxu0 0
        %1631 = vmatprep.subr.bf16.mxu0 0
        %1632 = vmatpush1.bf16.xpose.msra.mxu0 0
        %1633 = vmatprep.mubr.bf16.mxu0 0
        %1634 = vmatmul.mubr.bf16.gmra.mrb[0].mxu0 %v1596
        %v1635 = vpop.f32.mrb[0].mxu0
        %v1636 = vadd.f32 %v1592, %v1635
        %v1637 = vpop.f32.mrb[0].mxu0
        %v1638 = vpop.f32.mrb[0].mxu0
        %v1639 = vpop.f32.mrb[0].mxu0
        %1640 = vdwg.mxu0
        %v1642 = vsel %vm1594, %v1576, 0
        %v1645 = vsel %vm1594, %v1584, 0
        %1647 = vmatprep.subr.bf16.mxu0 0
        %1648 = vmatpush1.bf16.xpose.msra.mxu0 %v1645
        %1649 = vmatprep.subr.bf16.mxu0 0
        %1650 = vmatpush1.bf16.xpose.msra.mxu0 0
        %1651 = vmatprep.subr.bf16.mxu0 0
        %1652 = vmatpush1.bf16.xpose.msra.mxu0 0
        %1653 = vmatprep.subr.bf16.mxu0 0
        %1654 = vmatpush1.bf16.xpose.msra.mxu0 0
        %1655 = vmatprep.subr.bf16.mxu0 0
        %1656 = vmatpush1.bf16.xpose.msra.mxu0 0
        %1657 = vmatprep.subr.bf16.mxu0 0
        %1658 = vmatpush1.bf16.xpose.msra.mxu0 0
        %1659 = vmatprep.subr.bf16.mxu0 0
        %1660 = vmatpush1.bf16.xpose.msra.mxu0 0
        %1661 = vmatprep.subr.bf16.mxu0 0
        %1662 = vmatpush1.bf16.xpose.msra.mxu0 0
        %1663 = vmatprep.subr.bf16.mxu0 0
        %1664 = vmatpush1.bf16.xpose.msra.mxu0 0
        %1665 = vmatprep.subr.bf16.mxu0 0
        %1666 = vmatpush1.bf16.xpose.msra.mxu0 0
        %1667 = vmatprep.subr.bf16.mxu0 0
        %1668 = vmatpush1.bf16.xpose.msra.mxu0 0
        %1669 = vmatprep.subr.bf16.mxu0 0
        %1670 = vmatpush1.bf16.xpose.msra.mxu0 0
        %1671 = vmatprep.subr.bf16.mxu0 0
        %1672 = vmatpush1.bf16.xpose.msra.mxu0 0
        %1673 = vmatprep.subr.bf16.mxu0 0
        %1674 = vmatpush1.bf16.xpose.msra.mxu0 0
        %1675 = vmatprep.subr.bf16.mxu0 0
        %1676 = vmatpush1.bf16.xpose.msra.mxu0 0
        %1677 = vmatprep.subr.bf16.mxu0 0
        %1678 = vmatpush1.bf16.xpose.msra.mxu0 0
        %1679 = vmatprep.mubr.bf16.mxu0 0
        %1680 = vmatmul.mubr.bf16.gmra.mrb[0].mxu0 %v1642
        %v1681 = vpop.f32.mrb[0].mxu0
        %v1682 = vadd.f32 %v1592, %v1681
        %v1683 = vpop.f32.mrb[0].mxu0
        %v1684 = vpop.f32.mrb[0].mxu0
        %v1685 = vpop.f32.mrb[0].mxu0
        %1686 = vdwg.mxu0
        %v1688 = vsel %vm1594, %v1579, 0
        %v1691 = vsel %vm1594, %v1585, 0
        %1693 = vmatprep.subr.bf16.mxu0 0
        %1694 = vmatpush1.bf16.xpose.msra.mxu0 %v1691
        %1695 = vmatprep.subr.bf16.mxu0 0
        %1696 = vmatpush1.bf16.xpose.msra.mxu0 0
        %1697 = vmatprep.subr.bf16.mxu0 0
        %1698 = vmatpush1.bf16.xpose.msra.mxu0 0
        %1699 = vmatprep.subr.bf16.mxu0 0
        %1700 = vmatpush1.bf16.xpose.msra.mxu0 0
        %1701 = vmatprep.subr.bf16.mxu0 0
        %1702 = vmatpush1.bf16.xpose.msra.mxu0 0
        %1703 = vmatprep.subr.bf16.mxu0 0
        %1704 = vmatpush1.bf16.xpose.msra.mxu0 0
        %1705 = vmatprep.subr.bf16.mxu0 0
        %1706 = vmatpush1.bf16.xpose.msra.mxu0 0
        %1707 = vmatprep.subr.bf16.mxu0 0
        %1708 = vmatpush1.bf16.xpose.msra.mxu0 0
        %1709 = vmatprep.subr.bf16.mxu0 0
        %1710 = vmatpush1.bf16.xpose.msra.mxu0 0
        %1711 = vmatprep.subr.bf16.mxu0 0
        %1712 = vmatpush1.bf16.xpose.msra.mxu0 0
        %1713 = vmatprep.subr.bf16.mxu0 0
        %1714 = vmatpush1.bf16.xpose.msra.mxu0 0
        %1715 = vmatprep.subr.bf16.mxu0 0
        %1716 = vmatpush1.bf16.xpose.msra.mxu0 0
        %1717 = vmatprep.subr.bf16.mxu0 0
        %1718 = vmatpush1.bf16.xpose.msra.mxu0 0
        %1719 = vmatprep.subr.bf16.mxu0 0
        %1720 = vmatpush1.bf16.xpose.msra.mxu0 0
        %1721 = vmatprep.subr.bf16.mxu0 0
        %1722 = vmatpush1.bf16.xpose.msra.mxu0 0
        %1723 = vmatprep.subr.bf16.mxu0 0
        %1724 = vmatpush1.bf16.xpose.msra.mxu0 0
        %1725 = vmatprep.mubr.bf16.mxu0 0
        %1726 = vmatmul.mubr.bf16.gmra.mrb[0].mxu0 %v1688
        %v1727 = vpop.f32.mrb[0].mxu0
        %v1728 = vadd.f32 %v1592, %v1727
        %v1729 = vpop.f32.mrb[0].mxu0
        %v1730 = vpop.f32.mrb[0].mxu0
        %v1731 = vpop.f32.mrb[0].mxu0
        %1732 = vdwg.mxu0
        %v1734 = vsel %vm1594, %v1582, 0
        %v1737 = vsel %vm1594, %v1586, 0
        %1739 = vmatprep.subr.bf16.mxu0 0
        %1740 = vmatpush1.bf16.xpose.msra.mxu0 %v1737
        %1741 = vmatprep.subr.bf16.mxu0 0
        %1742 = vmatpush1.bf16.xpose.msra.mxu0 0
        %1743 = vmatprep.subr.bf16.mxu0 0
        %1744 = vmatpush1.bf16.xpose.msra.mxu0 0
        %1745 = vmatprep.subr.bf16.mxu0 0
        %1746 = vmatpush1.bf16.xpose.msra.mxu0 0
        %1747 = vmatprep.subr.bf16.mxu0 0
        %1748 = vmatpush1.bf16.xpose.msra.mxu0 0
        %1749 = vmatprep.subr.bf16.mxu0 0
        %1750 = vmatpush1.bf16.xpose.msra.mxu0 0
        %1751 = vmatprep.subr.bf16.mxu0 0
        %1752 = vmatpush1.bf16.xpose.msra.mxu0 0
        %1753 = vmatprep.subr.bf16.mxu0 0
        %1754 = vmatpush1.bf16.xpose.msra.mxu0 0
        %1755 = vmatprep.subr.bf16.mxu0 0
        %1756 = vmatpush1.bf16.xpose.msra.mxu0 0
        %1757 = vmatprep.subr.bf16.mxu0 0
        %1758 = vmatpush1.bf16.xpose.msra.mxu0 0
        %1759 = vmatprep.subr.bf16.mxu0 0
        %1760 = vmatpush1.bf16.xpose.msra.mxu0 0
        %1761 = vmatprep.subr.bf16.mxu0 0
        %1762 = vmatpush1.bf16.xpose.msra.mxu0 0
        %1763 = vmatprep.subr.bf16.mxu0 0
        %1764 = vmatpush1.bf16.xpose.msra.mxu0 0
        %1765 = vmatprep.subr.bf16.mxu0 0
        %1766 = vmatpush1.bf16.xpose.msra.mxu0 0
        %1767 = vmatprep.subr.bf16.mxu0 0
        %1768 = vmatpush1.bf16.xpose.msra.mxu0 0
        %1769 = vmatprep.subr.bf16.mxu0 0
        %1770 = vmatpush1.bf16.xpose.msra.mxu0 0
        %1771 = vmatprep.mubr.bf16.mxu0 0
        %1772 = vmatmul.mubr.bf16.gmra.mrb[0].mxu0 %v1734
        %v1773 = vpop.f32.mrb[0].mxu0
        %v1774 = vadd.f32 %v1592, %v1773
        %v1775 = vpop.f32.mrb[0].mxu0
        %v1776 = vpop.f32.mrb[0].mxu0
        %v1777 = vpop.f32.mrb[0].mxu0
        %1778 = vdwg.mxu0
        %v1779 = vsel %vm1594, %v1636, -inf
        %1780 = vmax.xlane.f32.xlu0 %v1779
        %v1781 = vpop.xlane.xlu0 %1780
        %v1782 = vsel %vm1594, %v1682, -inf
        %1783 = vmax.xlane.f32.xlu0 %v1782
        %v1784 = vpop.xlane.xlu0 %1783
        %v1785 = vsel %vm1594, %v1728, -inf
        %1786 = vmax.xlane.f32.xlu0 %v1785
        %v1787 = vpop.xlane.xlu0 %1786
        %v1788 = vsel %vm1594, %v1774, -inf
        %1789 = vmax.xlane.f32.xlu0 %v1788
        %v1790 = vpop.xlane.xlu0 %1789
        %v1791 = vsub.f32 %v1636, %v1781
        %v1792 = vsub.f32 %v1682, %v1784
        %v1793 = vsub.f32 %v1728, %v1787
        %v1794 = vsub.f32 %v1774, %v1790
        %v1795 = vmul.f32 %v1791, 1.442695
        %v1796 = vpow.pop %v1795
        %v1797 = vmul.f32 %v1792, 1.442695
        %v1798 = vpow.pop %v1797
        %v1799 = vmul.f32 %v1793, 1.442695
        %v1800 = vpow.pop %v1799
        %v1801 = vmul.f32 %v1794, 1.442695
        %v1802 = vpow.pop %v1801
        %v1803 = vsel %vm1594, %v1796, 0.0
        %1804 = vadd.xlane.f32.xlu0 %v1803
        %v1805 = vpop.xlane.xlu0 %1804
        %v1806 = vsel %vm1594, %v1798, 0.0
        %1807 = vadd.xlane.f32.xlu0 %v1806
        %v1808 = vpop.xlane.xlu0 %1807
        %v1809 = vsel %vm1594, %v1800, 0.0
        %1810 = vadd.xlane.f32.xlu0 %v1809
        %v1811 = vpop.xlane.xlu0 %1810
        %v1812 = vsel %vm1594, %v1802, 0.0
        %1813 = vadd.xlane.f32.xlu0 %v1812
        %v1814 = vpop.xlane.xlu0 %1813
        %v1815 = vpack.c.bf16 %v1796, %v1796
        %v1816 = vpack.c.bf16 %v1798, %v1798
        %v1817 = vpack.c.bf16 %v1800, %v1800
        %v1818 = vpack.c.bf16 %v1802, %v1802
        %v1819 = vld [vmem:[#allocation3] sm:$0xf]
        %v1820 = vld [vmem:[#allocation3 + $0x4] sm:$0xf]
        %v1821 = vld [vmem:[#allocation3 + $0x8] sm:$0xf]
        %v1822 = vld [vmem:[#allocation3 + $0xc] sm:$0xf]
        %v1824 = vsel %vm1594, %v1815, 0
        %vm1826 = vcmask 1043456
        %v1828 = vsel %vm1826, %v1819, 0
        %1830 = vmatprep.subr.bf16.mxu0 0
        %1831 = vmatpush1.bf16.msra.mxu0 %v1828
        %1832 = vmatprep.subr.bf16.mxu0 0
        %1833 = vmatpush1.bf16.msra.mxu0 0
        %1834 = vmatprep.subr.bf16.mxu0 0
        %1835 = vmatpush1.bf16.msra.mxu0 0
        %1836 = vmatprep.subr.bf16.mxu0 0
        %1837 = vmatpush1.bf16.msra.mxu0 0
        %1838 = vmatprep.subr.bf16.mxu0 0
        %1839 = vmatpush1.bf16.msra.mxu0 0
        %1840 = vmatprep.subr.bf16.mxu0 0
        %1841 = vmatpush1.bf16.msra.mxu0 0
        %1842 = vmatprep.subr.bf16.mxu0 0
        %1843 = vmatpush1.bf16.msra.mxu0 0
        %1844 = vmatprep.subr.bf16.mxu0 0
        %1845 = vmatpush1.bf16.msra.mxu0 0
        %1846 = vmatprep.subr.bf16.mxu0 0
        %1847 = vmatpush1.bf16.msra.mxu0 0
        %1848 = vmatprep.subr.bf16.mxu0 0
        %1849 = vmatpush1.bf16.msra.mxu0 0
        %1850 = vmatprep.subr.bf16.mxu0 0
        %1851 = vmatpush1.bf16.msra.mxu0 0
        %1852 = vmatprep.subr.bf16.mxu0 0
        %1853 = vmatpush1.bf16.msra.mxu0 0
        %1854 = vmatprep.subr.bf16.mxu0 0
        %1855 = vmatpush1.bf16.msra.mxu0 0
        %1856 = vmatprep.subr.bf16.mxu0 0
        %1857 = vmatpush1.bf16.msra.mxu0 0
        %1858 = vmatprep.subr.bf16.mxu0 0
        %1859 = vmatpush1.bf16.msra.mxu0 0
        %1860 = vmatprep.subr.bf16.mxu0 0
        %1861 = vmatpush1.bf16.msra.mxu0 0
        %1862 = vmatprep.mubr.bf16.mxu0 0
        %1863 = vmatmul.mubr.bf16.gmra.mrb[0].mxu0 %v1824
        %v1864 = vpop.f32.mrb[0].mxu0
        %v1865 = vadd.f32 0.0, %v1864
        %v1866 = vpop.f32.mrb[0].mxu0
        %v1867 = vpop.f32.mrb[0].mxu0
        %v1868 = vpop.f32.mrb[0].mxu0
        %1869 = vdwg.mxu0
        %v1871 = vsel %vm1594, %v1816, 0
        %v1874 = vsel %vm1826, %v1820, 0
        %1876 = vmatprep.subr.bf16.mxu0 0
        %1877 = vmatpush1.bf16.msra.mxu0 %v1874
        %1878 = vmatprep.subr.bf16.mxu0 0
        %1879 = vmatpush1.bf16.msra.mxu0 0
        %1880 = vmatprep.subr.bf16.mxu0 0
        %1881 = vmatpush1.bf16.msra.mxu0 0
        %1882 = vmatprep.subr.bf16.mxu0 0
        %1883 = vmatpush1.bf16.msra.mxu0 0
        %1884 = vmatprep.subr.bf16.mxu0 0
        %1885 = vmatpush1.bf16.msra.mxu0 0
        %1886 = vmatprep.subr.bf16.mxu0 0
        %1887 = vmatpush1.bf16.msra.mxu0 0
        %1888 = vmatprep.subr.bf16.mxu0 0
        %1889 = vmatpush1.bf16.msra.mxu0 0
        %1890 = vmatprep.subr.bf16.mxu0 0
        %1891 = vmatpush1.bf16.msra.mxu0 0
        %1892 = vmatprep.subr.bf16.mxu0 0
        %1893 = vmatpush1.bf16.msra.mxu0 0
        %1894 = vmatprep.subr.bf16.mxu0 0
        %1895 = vmatpush1.bf16.msra.mxu0 0
        %1896 = vmatprep.subr.bf16.mxu0 0
        %1897 = vmatpush1.bf16.msra.mxu0 0
        %1898 = vmatprep.subr.bf16.mxu0 0
        %1899 = vmatpush1.bf16.msra.mxu0 0
        %1900 = vmatprep.subr.bf16.mxu0 0
        %1901 = vmatpush1.bf16.msra.mxu0 0
        %1902 = vmatprep.subr.bf16.mxu0 0
        %1903 = vmatpush1.bf16.msra.mxu0 0
        %1904 = vmatprep.subr.bf16.mxu0 0
        %1905 = vmatpush1.bf16.msra.mxu0 0
        %1906 = vmatprep.subr.bf16.mxu0 0
        %1907 = vmatpush1.bf16.msra.mxu0 0
        %1908 = vmatprep.mubr.bf16.mxu0 0
        %1909 = vmatmul.mubr.bf16.gmra.mrb[0].mxu0 %v1871
        %v1910 = vpop.f32.mrb[0].mxu0
        %v1911 = vadd.f32 0.0, %v1910
        %v1912 = vpop.f32.mrb[0].mxu0
        %v1913 = vpop.f32.mrb[0].mxu0
        %v1914 = vpop.f32.mrb[0].mxu0
        %1915 = vdwg.mxu0
        %v1917 = vsel %vm1594, %v1817, 0
        %v1920 = vsel %vm1826, %v1821, 0
        %1922 = vmatprep.subr.bf16.mxu0 0
        %1923 = vmatpush1.bf16.msra.mxu0 %v1920
        %1924 = vmatprep.subr.bf16.mxu0 0
        %1925 = vmatpush1.bf16.msra.mxu0 0
        %1926 = vmatprep.subr.bf16.mxu0 0
        %1927 = vmatpush1.bf16.msra.mxu0 0
        %1928 = vmatprep.subr.bf16.mxu0 0
        %1929 = vmatpush1.bf16.msra.mxu0 0
        %1930 = vmatprep.subr.bf16.mxu0 0
        %1931 = vmatpush1.bf16.msra.mxu0 0
        %1932 = vmatprep.subr.bf16.mxu0 0
        %1933 = vmatpush1.bf16.msra.mxu0 0
        %1934 = vmatprep.subr.bf16.mxu0 0
        %1935 = vmatpush1.bf16.msra.mxu0 0
        %1936 = vmatprep.subr.bf16.mxu0 0
        %1937 = vmatpush1.bf16.msra.mxu0 0
        %1938 = vmatprep.subr.bf16.mxu0 0
        %1939 = vmatpush1.bf16.msra.mxu0 0
        %1940 = vmatprep.subr.bf16.mxu0 0
        %1941 = vmatpush1.bf16.msra.mxu0 0
        %1942 = vmatprep.subr.bf16.mxu0 0
        %1943 = vmatpush1.bf16.msra.mxu0 0
        %1944 = vmatprep.subr.bf16.mxu0 0
        %1945 = vmatpush1.bf16.msra.mxu0 0
        %1946 = vmatprep.subr.bf16.mxu0 0
        %1947 = vmatpush1.bf16.msra.mxu0 0
        %1948 = vmatprep.subr.bf16.mxu0 0
        %1949 = vmatpush1.bf16.msra.mxu0 0
        %1950 = vmatprep.subr.bf16.mxu0 0
        %1951 = vmatpush1.bf16.msra.mxu0 0
        %1952 = vmatprep.subr.bf16.mxu0 0
        %1953 = vmatpush1.bf16.msra.mxu0 0
        %1954 = vmatprep.mubr.bf16.mxu0 0
        %1955 = vmatmul.mubr.bf16.gmra.mrb[0].mxu0 %v1917
        %v1956 = vpop.f32.mrb[0].mxu0
        %v1957 = vadd.f32 0.0, %v1956
        %v1958 = vpop.f32.mrb[0].mxu0
        %v1959 = vpop.f32.mrb[0].mxu0
        %v1960 = vpop.f32.mrb[0].mxu0
        %1961 = vdwg.mxu0
        %v1963 = vsel %vm1594, %v1818, 0
        %v1966 = vsel %vm1826, %v1822, 0
        %1968 = vmatprep.subr.bf16.mxu0 0
        %1969 = vmatpush1.bf16.msra.mxu0 %v1966
        %1970 = vmatprep.subr.bf16.mxu0 0
        %1971 = vmatpush1.bf16.msra.mxu0 0
        %1972 = vmatprep.subr.bf16.mxu0 0
        %1973 = vmatpush1.bf16.msra.mxu0 0
        %1974 = vmatprep.subr.bf16.mxu0 0
        %1975 = vmatpush1.bf16.msra.mxu0 0
        %1976 = vmatprep.subr.bf16.mxu0 0
        %1977 = vmatpush1.bf16.msra.mxu0 0
        %1978 = vmatprep.subr.bf16.mxu0 0
        %1979 = vmatpush1.bf16.msra.mxu0 0
        %1980 = vmatprep.subr.bf16.mxu0 0
        %1981 = vmatpush1.bf16.msra.mxu0 0
        %1982 = vmatprep.subr.bf16.mxu0 0
        %1983 = vmatpush1.bf16.msra.mxu0 0
        %1984 = vmatprep.subr.bf16.mxu0 0
        %1985 = vmatpush1.bf16.msra.mxu0 0
        %1986 = vmatprep.subr.bf16.mxu0 0
        %1987 = vmatpush1.bf16.msra.mxu0 0
        %1988 = vmatprep.subr.bf16.mxu0 0
        %1989 = vmatpush1.bf16.msra.mxu0 0
        %1990 = vmatprep.subr.bf16.mxu0 0
        %1991 = vmatpush1.bf16.msra.mxu0 0
        %1992 = vmatprep.subr.bf16.mxu0 0
        %1993 = vmatpush1.bf16.msra.mxu0 0
        %1994 = vmatprep.subr.bf16.mxu0 0
        %1995 = vmatpush1.bf16.msra.mxu0 0
        %1996 = vmatprep.subr.bf16.mxu0 0
        %1997 = vmatpush1.bf16.msra.mxu0 0
        %1998 = vmatprep.subr.bf16.mxu0 0
        %1999 = vmatpush1.bf16.msra.mxu0 0
        %2000 = vmatprep.mubr.bf16.mxu0 0
        %2001 = vmatmul.mubr.bf16.gmra.mrb[0].mxu0 %v1963
        %v2002 = vpop.f32.mrb[0].mxu0
        %v2003 = vadd.f32 0.0, %v2002
        %v2004 = vpop.f32.mrb[0].mxu0
        %v2005 = vpop.f32.mrb[0].mxu0
        %v2006 = vpop.f32.mrb[0].mxu0
        %2007 = vdwg.mxu0
        %v2008 = vrcp.pop %v1805
        %v2009 = vrcp.pop %v1808
        %v2010 = vrcp.pop %v1811
        %v2011 = vrcp.pop %v1814
        %v2012 = vmul.f32 %v1865, %v2008
        %v2013 = vmul.f32 %v1911, %v2009
        %v2014 = vmul.f32 %v1957, %v2010
        %v2015 = vmul.f32 %v2003, %v2011
        %v2016 = vpack.c.bf16 %v2012, %v2012
        %v2018 = vunpack.c.l.s4 1983009808
        %v2019 = vunpack.c.0.s8 %v2018
        %v2020 = vlaneseq
        %v2021 = vshrl.u32 %v2020, 7
        %v2022 = vsub.s32 %v2019, %v2021
        %v2023 = vrot.slane %v2016, %v2022
        %v2024 = vpack.c.bf16 %v2014, %v2014
        %v2026 = vunpack.c.l.s4 1983009808
        %v2027 = vunpack.c.0.s8 %v2026
        %v2028 = vlaneseq
        %v2029 = vshrl.u32 %v2028, 7
        %v2030 = vsub.s32 %v2027, %v2029
        %v2031 = vrot.slane %v2024, %v2030
        %v2032 = vcombine.low %v2023, %v2031
        %v2033 = vcombine.high %v2023, %v2031
        %v2035 = vunpack.c.l.s4 1934713408
        %v2036 = vunpack.c.0.s8 %v2035
        %v2037 = vlaneseq
        %v2038 = vshrl.u32 %v2037, 7
        %v2039 = vsub.s32 %v2036, %v2038
        %v2040 = vrot.slane %v2032, %v2039
        %v2042 = vunpack.c.l.s4 1934713408
        %v2043 = vunpack.c.0.s8 %v2042
        %v2044 = vlaneseq
        %v2045 = vshrl.u32 %v2044, 7
        %v2046 = vsub.s32 %v2043, %v2045
        %v2047 = vrot.slane %v2033, %v2046
        %v2048 = vcombine.high %v2040, 0
        %v2049 = vcombine.high %v2047, 0
        %v2050 = vpack.c.bf16 %v2013, %v2013
        %v2052 = vunpack.c.l.s4 1983009808
        %v2053 = vunpack.c.0.s8 %v2052
        %v2054 = vlaneseq
        %v2055 = vshrl.u32 %v2054, 7
        %v2056 = vsub.s32 %v2053, %v2055
        %v2057 = vrot.slane %v2050, %v2056
        %v2058 = vpack.c.bf16 %v2015, %v2015
        %v2060 = vunpack.c.l.s4 1983009808
        %v2061 = vunpack.c.0.s8 %v2060
        %v2062 = vlaneseq
        %v2063 = vshrl.u32 %v2062, 7
        %v2064 = vsub.s32 %v2061, %v2063
        %v2065 = vrot.slane %v2058, %v2064
        %v2066 = vcombine.low %v2057, %v2065
        %v2067 = vcombine.high %v2057, %v2065
        %v2069 = vunpack.c.l.s4 1934713408
        %v2070 = vunpack.c.0.s8 %v2069
        %v2071 = vlaneseq
        %v2072 = vshrl.u32 %v2071, 7
        %v2073 = vsub.s32 %v2070, %v2072
        %v2074 = vrot.slane %v2066, %v2073
        %v2076 = vunpack.c.l.s4 1934713408
        %v2077 = vunpack.c.0.s8 %v2076
        %v2078 = vlaneseq
        %v2079 = vshrl.u32 %v2078, 7
        %v2080 = vsub.s32 %v2077, %v2079
        %v2081 = vrot.slane %v2067, %v2080
        %v2082 = vcombine.high %v2074, 0
        %v2083 = vcombine.high %v2081, 0
        %v2086 = vpack.i.b16 %v2074, %v2040
        %v2088 = vshrl.u32 %v2040, 16
        %v2089 = vshrl.u32 %v2074, 16
        %v2090 = vpack.i.b16 %v2089, %v2088
        %v2094 = vpack.i.b16 %v2082, %v2048
        %v2096 = vshrl.u32 %v2048, 16
        %v2097 = vshrl.u32 %v2082, 16
        %v2098 = vpack.i.b16 %v2097, %v2096
        %v2102 = vpack.i.b16 %v2081, %v2047
        %v2104 = vshrl.u32 %v2047, 16
        %v2105 = vshrl.u32 %v2081, 16
        %v2106 = vpack.i.b16 %v2105, %v2104
        %v2110 = vpack.i.b16 %v2083, %v2049
        %v2112 = vshrl.u32 %v2049, 16
        %v2113 = vshrl.u32 %v2083, 16
        %v2114 = vpack.i.b16 %v2113, %v2112
        %v2116 = vcombine.low %v2086, %v2102
        %v2118 = vunpack.c.l.s4 1983009808
        %v2119 = vunpack.c.0.s8 %v2118
        %v2120 = vlaneseq
        %v2121 = vshrl.u32 %v2120, 7
        %v2122 = vsub.s32 %v2119, %v2121
        %v2123 = vrot.slane %v2116, %v2122
        %v2124 = vcombine.low %v2094, %v2110
        %v2126 = vunpack.c.l.s4 1983009808
        %v2127 = vunpack.c.0.s8 %v2126
        %v2128 = vlaneseq
        %v2129 = vshrl.u32 %v2128, 7
        %v2130 = vsub.s32 %v2127, %v2129
        %v2131 = vrot.slane %v2124, %v2130
        %v2132 = vcombine.low %v2123, %v2131
        %v2134 = vunpack.c.l.s4 1934713408
        %v2135 = vunpack.c.0.s8 %v2134
        %v2136 = vlaneseq
        %v2137 = vshrl.u32 %v2136, 7
        %v2138 = vsub.s32 %v2135, %v2137
        %v2139 = vrot.slane %v2132, %v2138
        %v2140 = vcombine.high %v2139, 0
        %v2141 = vcombine.low %v2090, %v2106
        %v2143 = vunpack.c.l.s4 1983009808
        %v2144 = vunpack.c.0.s8 %v2143
        %v2145 = vlaneseq
        %v2146 = vshrl.u32 %v2145, 7
        %v2147 = vsub.s32 %v2144, %v2146
        %v2148 = vrot.slane %v2141, %v2147
        %v2149 = vcombine.low %v2098, %v2114
        %v2151 = vunpack.c.l.s4 1983009808
        %v2152 = vunpack.c.0.s8 %v2151
        %v2153 = vlaneseq
        %v2154 = vshrl.u32 %v2153, 7
        %v2155 = vsub.s32 %v2152, %v2154
        %v2156 = vrot.slane %v2149, %v2155
        %v2157 = vcombine.low %v2148, %v2156
        %v2159 = vunpack.c.l.s4 1934713408
        %v2160 = vunpack.c.0.s8 %v2159
        %v2161 = vlaneseq
        %v2162 = vshrl.u32 %v2161, 7
        %v2163 = vsub.s32 %v2160, %v2162
        %v2164 = vrot.slane %v2157, %v2163
        %v2165 = vcombine.high %v2164, 0
        %v2168 = vpack.i.b16 %v2164, %v2139
        %v2169 = vshrl.u32 %v2139, 16
        %v2170 = vshrl.u32 %v2164, 16
        %v2171 = vpack.i.b16 %v2170, %v2169
        %v2174 = vpack.i.b16 %v2165, %v2140
        %v2175 = vshrl.u32 %v2140, 16
        %v2176 = vshrl.u32 %v2165, 16
        %v2177 = vpack.i.b16 %v2176, %v2175
        %2178 = vrot.lane.b32.xlu0 %v2171, 8
        %v2179 = vpop.permute.xlu0 %2178
        %2180 = vrot.lane.b32.xlu0 %v2174, 16
        %v2181 = vpop.permute.xlu0 %2180
        %2182 = vrot.lane.b32.xlu0 %v2177, 24
        %v2183 = vpop.permute.xlu0 %2182
        %v2186 = vsel %vm1594, %v2168, %v2179
        %vm2187 = vcmask 130048
        %v2189 = vsel %vm2187, %v2186, %v2181
        %vm2190 = vcmask 195584
        %v2192 = vsel %vm2190, %v2189, %v2183
        %v2193 = vld [vmem:[#allocation18] sm:$0xf]
        %v2194 = vld [vmem:[#allocation18 + $0x4] sm:$0xf]
        %v2195 = vld [vmem:[#allocation18 + $0x8] sm:$0xf]
        %v2196 = vld [vmem:[#allocation18 + $0xc] sm:$0xf]
        %v2197 = vld [vmem:[#allocation19] sm:$0x1]
        %v2199 = vlaneseq
        %v2200 = vshrl.u32 %v2199, 7
        %v2201 = vsub.s32 0, %v2200
        %v2202 = vrot.slane %v2197, %v2201
        %v2208 = vunpack.c.l.b16 %v2193
        %v2209 = vunpack.c.l.b16 %v2194
        %v2210 = vunpack.c.l.b16 %v2195
        %v2211 = vunpack.c.l.b16 %v2196
        %v2212 = vpack.c.b16 %v2209, %v2208
        %v2213 = vpack.c.b16 %v2211, %v2210
        %v2216 = vsel %vm1370, %v2192, 0
        %2218 = vmatprep.subr.bf16.mxu0 0
        %2219 = vmatpush1.bf16.msra.mxu0 %v2212
        %2220 = vmatprep.subr.bf16.mxu0 0
        %2221 = vmatpush1.bf16.msra.mxu0 %v2213
        %2222 = vmatprep.subr.bf16.mxu0 0
        %2223 = vmatpush1.bf16.msra.mxu0 0
        %2224 = vmatprep.subr.bf16.mxu0 0
        %2225 = vmatpush1.bf16.msra.mxu0 0
        %2226 = vmatprep.subr.bf16.mxu0 0
        %2227 = vmatpush1.bf16.msra.mxu0 0
        %2228 = vmatprep.subr.bf16.mxu0 0
        %2229 = vmatpush1.bf16.msra.mxu0 0
        %2230 = vmatprep.subr.bf16.mxu0 0
        %2231 = vmatpush1.bf16.msra.mxu0 0
        %2232 = vmatprep.subr.bf16.mxu0 0
        %2233 = vmatpush1.bf16.msra.mxu0 0
        %2234 = vmatprep.subr.bf16.mxu0 0
        %2235 = vmatpush1.bf16.msra.mxu0 0
        %2236 = vmatprep.subr.bf16.mxu0 0
        %2237 = vmatpush1.bf16.msra.mxu0 0
        %2238 = vmatprep.subr.bf16.mxu0 0
        %2239 = vmatpush1.bf16.msra.mxu0 0
        %2240 = vmatprep.subr.bf16.mxu0 0
        %2241 = vmatpush1.bf16.msra.mxu0 0
        %2242 = vmatprep.subr.bf16.mxu0 0
        %2243 = vmatpush1.bf16.msra.mxu0 0
        %2244 = vmatprep.subr.bf16.mxu0 0
        %2245 = vmatpush1.bf16.msra.mxu0 0
        %2246 = vmatprep.subr.bf16.mxu0 0
        %2247 = vmatpush1.bf16.msra.mxu0 0
        %2248 = vmatprep.subr.bf16.mxu0 0
        %2249 = vmatpush1.bf16.msra.mxu0 0
        %2250 = vmatprep.mubr.bf16.mxu0 0
        %2251 = vmatmul.mubr.bf16.gmra.mrb[0].mxu0 %v2216
        %v2252 = vpop.f32.mrb[0].mxu0
        %v2253 = vadd.f32 %v2202, %v2252
        %v2254 = vpop.f32.mrb[0].mxu0
        %v2255 = vpop.f32.mrb[0].mxu0
        %v2256 = vpop.f32.mrb[0].mxu0
        %2257 = vdwg.mxu0
        %v2258 = vadd.f32 %v2253, %v1345
        %v2259 = vld [vmem:[#allocation21] sm:$0x1]
        %v2260 = vld [vmem:[#allocation22] sm:$0x1]
        %v2261 = vsel %vm1370, %v2258, 0.0
        %2262 = vadd.xlane.f32.xlu0 %v2261
        %v2263 = vpop.xlane.xlu0 %2262
        %v2264 = vrcp.pop 32.0
        %v2265 = vmul.f32 %v2263, %v2264
        %v2266 = vsub.f32 %v2258, %v2265
        %v2267 = vmul.f32 %v2266, %v2266
        %v2268 = vsel %vm1370, %v2267, 0.0
        %2269 = vadd.xlane.f32.xlu0 %v2268
        %v2270 = vpop.xlane.xlu0 %2269
        %v2271 = vmul.f32 %v2270, %v2264
        %v2272 = vadd.f32 %v2271, 1e-12
        %v2273 = vrsqrt.pop %v2272
        %v2274 = vmul.f32 %v2266, %v2273
        %v2276 = vlaneseq
        %v2277 = vshrl.u32 %v2276, 7
        %v2278 = vsub.s32 0, %v2277
        %v2279 = vrot.slane %v2259, %v2278
        %v2281 = vmul.f32 %v2274, %v2279
        %v2283 = vlaneseq
        %v2284 = vshrl.u32 %v2283, 7
        %v2285 = vsub.s32 0, %v2284
        %v2286 = vrot.slane %v2260, %v2285
        %v2288 = vadd.f32 %v2281, %v2286
        %v2289 = vpack.c.bf16 %v2288, %v2288
        %v2290 = vld [vmem:[#allocation24] sm:$0xf]
        %v2291 = vld [vmem:[#allocation24 + $0x4] sm:$0xf]
        %v2292 = vld [vmem:[#allocation24 + $0x8] sm:$0xf]
        %v2293 = vld [vmem:[#allocation24 + $0xc] sm:$0xf]
        %v2294 = vld [vmem:[#allocation25] sm:$0x1]
        %v2296 = vlaneseq
        %v2297 = vshrl.u32 %v2296, 7
        %v2298 = vsub.s32 0, %v2297
        %v2299 = vrot.slane %v2294, %v2298
        %v2305 = vunpack.c.l.b16 %v2290
        %v2306 = vunpack.c.l.b16 %v2291
        %v2307 = vunpack.c.l.b16 %v2292
        %v2308 = vunpack.c.l.b16 %v2293
        %v2309 = vpack.c.b16 %v2306, %v2305
        %v2310 = vpack.c.b16 %v2308, %v2307
        %v2314 = vsel %vm1370, %v2289, 0
        %2316 = vmatprep.subr.bf16.mxu0 0
        %2317 = vmatpush1.bf16.msra.mxu0 %v2309
        %2318 = vmatprep.subr.bf16.mxu0 0
        %2319 = vmatpush1.bf16.msra.mxu0 %v2310
        %2320 = vmatprep.subr.bf16.mxu0 0
        %2321 = vmatpush1.bf16.msra.mxu0 0
        %2322 = vmatprep.subr.bf16.mxu0 0
        %2323 = vmatpush1.bf16.msra.mxu0 0
        %2324 = vmatprep.subr.bf16.mxu0 0
        %2325 = vmatpush1.bf16.msra.mxu0 0
        %2326 = vmatprep.subr.bf16.mxu0 0
        %2327 = vmatpush1.bf16.msra.mxu0 0
        %2328 = vmatprep.subr.bf16.mxu0 0
        %2329 = vmatpush1.bf16.msra.mxu0 0
        %2330 = vmatprep.subr.bf16.mxu0 0
        %2331 = vmatpush1.bf16.msra.mxu0 0
        %2332 = vmatprep.subr.bf16.mxu0 0
        %2333 = vmatpush1.bf16.msra.mxu0 0
        %2334 = vmatprep.subr.bf16.mxu0 0
        %2335 = vmatpush1.bf16.msra.mxu0 0
        %2336 = vmatprep.subr.bf16.mxu0 0
        %2337 = vmatpush1.bf16.msra.mxu0 0
        %2338 = vmatprep.subr.bf16.mxu0 0
        %2339 = vmatpush1.bf16.msra.mxu0 0
        %2340 = vmatprep.subr.bf16.mxu0 0
        %2341 = vmatpush1.bf16.msra.mxu0 0
        %2342 = vmatprep.subr.bf16.mxu0 0
        %2343 = vmatpush1.bf16.msra.mxu0 0
        %2344 = vmatprep.subr.bf16.mxu0 0
        %2345 = vmatpush1.bf16.msra.mxu0 0
        %2346 = vmatprep.subr.bf16.mxu0 0
        %2347 = vmatpush1.bf16.msra.mxu0 0
        %2348 = vmatprep.mubr.bf16.mxu0 0
        %2349 = vmatmul.mubr.bf16.gmra.mrb[0].mxu0 %v2314
        %v2350 = vpop.f32.mrb[0].mxu0
        %v2351 = vadd.f32 %v2299, %v2350
        %v2352 = vpop.f32.mrb[0].mxu0
        %v2353 = vpop.f32.mrb[0].mxu0
        %v2354 = vpop.f32.mrb[0].mxu0
        %2355 = vdwg.mxu0
        %v2356 = vmul.f32 %v2351, 0.5
        %v2357 = vmul.f32 %v2351, 0.044715
        %v2358 = vmul.f32 %v2357, %v2351
        %v2359 = vmul.f32 %v2358, %v2351
        %v2360 = vadd.f32 %v2351, %v2359
        %v2361 = vmul.f32 %v2360, 0.7978846
        %v2362 = vtanh.pop %v2361
        %v2363 = vadd.f32 %v2362, 1.0
        %v2364 = vmul.f32 %v2356, %v2363
        %v2365 = vpack.c.bf16 %v2364, %v2364
        %v2366 = vld [vmem:[#allocation27] sm:$0xf]
        %v2367 = vld [vmem:[#allocation27 + $0x4] sm:$0xf]
        %v2368 = vld [vmem:[#allocation27 + $0x8] sm:$0xf]
        %v2369 = vld [vmem:[#allocation27 + $0xc] sm:$0xf]
        %v2370 = vld [vmem:[#allocation27 + $0x10] sm:$0xf]
        %v2371 = vld [vmem:[#allocation27 + $0x14] sm:$0xf]
        %v2372 = vld [vmem:[#allocation27 + $0x18] sm:$0xf]
        %v2373 = vld [vmem:[#allocation27 + $0x1c] sm:$0xf]
        %v2374 = vld [vmem:[#allocation27 + $0x20] sm:$0xf]
        %v2375 = vld [vmem:[#allocation27 + $0x24] sm:$0xf]
        %v2376 = vld [vmem:[#allocation27 + $0x28] sm:$0xf]
        %v2377 = vld [vmem:[#allocation27 + $0x2c] sm:$0xf]
        %v2378 = vld [vmem:[#allocation27 + $0x30] sm:$0xf]
        %v2379 = vld [vmem:[#allocation27 + $0x34] sm:$0xf]
        %v2380 = vld [vmem:[#allocation27 + $0x38] sm:$0xf]
        %v2381 = vld [vmem:[#allocation27 + $0x3c] sm:$0xf]
        %v2382 = vld [vmem:[#allocation28] sm:$0x1]
        %v2384 = vlaneseq
        %v2385 = vshrl.u32 %v2384, 7
        %v2386 = vsub.s32 0, %v2385
        %v2387 = vrot.slane %v2382, %v2386
        %v2405 = vunpack.c.l.b16 %v2366
        %v2406 = vunpack.c.l.b16 %v2367
        %v2407 = vunpack.c.l.b16 %v2368
        %v2408 = vunpack.c.l.b16 %v2369
        %v2409 = vunpack.c.l.b16 %v2370
        %v2410 = vunpack.c.l.b16 %v2371
        %v2411 = vunpack.c.l.b16 %v2372
        %v2412 = vunpack.c.l.b16 %v2373
        %v2413 = vunpack.c.l.b16 %v2374
        %v2414 = vunpack.c.l.b16 %v2375
        %v2415 = vunpack.c.l.b16 %v2376
        %v2416 = vunpack.c.l.b16 %v2377
        %v2417 = vunpack.c.l.b16 %v2378
        %v2418 = vunpack.c.l.b16 %v2379
        %v2419 = vunpack.c.l.b16 %v2380
        %v2420 = vunpack.c.l.b16 %v2381
        %v2421 = vpack.c.b16 %v2406, %v2405
        %v2422 = vpack.c.b16 %v2408, %v2407
        %v2423 = vpack.c.b16 %v2410, %v2409
        %v2424 = vpack.c.b16 %v2412, %v2411
        %v2425 = vpack.c.b16 %v2414, %v2413
        %v2426 = vpack.c.b16 %v2416, %v2415
        %v2427 = vpack.c.b16 %v2418, %v2417
        %v2428 = vpack.c.b16 %v2420, %v2419
        %2437 = vmatprep.subr.bf16.mxu0 0
        %2438 = vmatpush1.bf16.msra.mxu0 %v2421
        %2439 = vmatprep.subr.bf16.mxu0 0
        %2440 = vmatpush1.bf16.msra.mxu0 %v2422
        %2441 = vmatprep.subr.bf16.mxu0 0
        %2442 = vmatpush1.bf16.msra.mxu0 %v2423
        %2443 = vmatprep.subr.bf16.mxu0 0
        %2444 = vmatpush1.bf16.msra.mxu0 %v2424
        %2445 = vmatprep.subr.bf16.mxu0 0
        %2446 = vmatpush1.bf16.msra.mxu0 %v2425
        %2447 = vmatprep.subr.bf16.mxu0 0
        %2448 = vmatpush1.bf16.msra.mxu0 %v2426
        %2449 = vmatprep.subr.bf16.mxu0 0
        %2450 = vmatpush1.bf16.msra.mxu0 %v2427
        %2451 = vmatprep.subr.bf16.mxu0 0
        %2452 = vmatpush1.bf16.msra.mxu0 %v2428
        %2453 = vmatprep.subr.bf16.mxu0 0
        %2454 = vmatpush1.bf16.msra.mxu0 0
        %2455 = vmatprep.subr.bf16.mxu0 0
        %2456 = vmatpush1.bf16.msra.mxu0 0
        %2457 = vmatprep.subr.bf16.mxu0 0
        %2458 = vmatpush1.bf16.msra.mxu0 0
        %2459 = vmatprep.subr.bf16.mxu0 0
        %2460 = vmatpush1.bf16.msra.mxu0 0
        %2461 = vmatprep.subr.bf16.mxu0 0
        %2462 = vmatpush1.bf16.msra.mxu0 0
        %2463 = vmatprep.subr.bf16.mxu0 0
        %2464 = vmatpush1.bf16.msra.mxu0 0
        %2465 = vmatprep.subr.bf16.mxu0 0
        %2466 = vmatpush1.bf16.msra.mxu0 0
        %2467 = vmatprep.subr.bf16.mxu0 0
        %2468 = vmatpush1.bf16.msra.mxu0 0
        %2469 = vmatprep.mubr.bf16.mxu0 0
        %2470 = vmatmul.mubr.bf16.gmra.mrb[0].mxu0 %v2365
        %v2471 = vpop.f32.mrb[0].mxu0
        %v2472 = vadd.f32 %v2387, %v2471
        %v2473 = vpop.f32.mrb[0].mxu0
        %v2474 = vpop.f32.mrb[0].mxu0
        %v2475 = vpop.f32.mrb[0].mxu0
        %2476 = vdwg.mxu0
        %v2477 = vadd.f32 %v2472, %v2288
        %v2478 = vld [vmem:[#allocation30] sm:$0x1]
        %v2479 = vld [vmem:[#allocation31] sm:$0x1]
        %v2480 = vsel %vm1370, %v2477, 0.0
        %2481 = vadd.xlane.f32.xlu0 %v2480
        %v2482 = vpop.xlane.xlu0 %2481
        %v2483 = vmul.f32 %v2482, %v2264
        %v2484 = vsub.f32 %v2477, %v2483
        %v2485 = vmul.f32 %v2484, %v2484
        %v2486 = vsel %vm1370, %v2485, 0.0
        %2487 = vadd.xlane.f32.xlu0 %v2486
        %v2488 = vpop.xlane.xlu0 %2487
        %v2489 = vmul.f32 %v2488, %v2264
        %v2490 = vadd.f32 %v2489, 1e-12
        %v2491 = vrsqrt.pop %v2490
        %v2492 = vmul.f32 %v2484, %v2491
        %v2494 = vlaneseq
        %v2495 = vshrl.u32 %v2494, 7
        %v2496 = vsub.s32 0, %v2495
        %v2497 = vrot.slane %v2478, %v2496
        %v2499 = vmul.f32 %v2492, %v2497
        %v2501 = vlaneseq
        %v2502 = vshrl.u32 %v2501, 7
        %v2503 = vsub.s32 0, %v2502
        %v2504 = vrot.slane %v2479, %v2503
        %v2506 = vadd.f32 %v2499, %v2504
        %2507 = vst.msk [vmem:[%s850] sm:$0xff] %vm1370, %v2506
        %s2508 = sand.u32 %s456, 1
        %s2509 = scalar_lea.sflag [#allocation6], %s2508
        %s2510 = sand.u32 %s456, 1
        %s2511 = smul.addr %s2510, 8
        %s2512 = scalar_lea.vmem [#allocation33], %s2511
        // Predicated region
        $region169: #{tpu_custom_call.1} parent=91 // pred_check
          %p2513 = pneg %p466
        $region170: #{tpu_custom_call.1} parent=91 // pred_check_branch
          %2515 = sbr.rel (%p2513) target = $region172
        $region171: #{tpu_custom_call.1} parent=91 // pred_region
          %s2517 = ssub.s32 128, 128
          %2518 = vsyncadd %s2509, %s2517
          %s2519 = sadd.s32 %s51, %s50
          %s2520 = smul.addr %s2519, 128
          %s2521 = scalar_lea.hbm %s18, %s2520
          %s2523 = sshll.u32 %s2512, 4
          %s2524 = int_to_ptr.vmem [resolvable:$true] %s2523
          %2526 = dma.vmem_to_hbm [thread:$0]  %s2524, 128, %s2521, %s2509
        $region172: #{tpu_custom_call.1} parent=91 // pred_fallthru
          _
      $region92: #{tpu_custom_call.1} parent=5 // pred_fallthru
        _
      %p2527 = scmp.le.s32.totalorder 2, %s41
      // Predicated region
      $region173: #{tpu_custom_call.1} parent=5 // pred_check
        %p2528 = pneg %p2527
      $region174: #{tpu_custom_call.1} parent=5 // pred_check_branch
        %2530 = sbr.rel (%p2528) target = $region176
      $region175: #{tpu_custom_call.1} parent=5 // pred_region
        %s2531 = ssub.s32 %s41, 2
        // Predicated region
        $region177: #{tpu_custom_call.1} parent=175 // pred_check
          %p2532 = pneg %p472
        $region178: #{tpu_custom_call.1} parent=175 // pred_check_branch
          %2534 = sbr.rel (%p2532) target = $region180
        $region179: #{tpu_custom_call.1} parent=175 // pred_region
          %s2535 = sand.u32 %s457, 1
          %s2536 = scalar_lea.sflag [#allocation6], %s2535
          %s2537 = sand.u32 %s457, 1
          %s2538 = smul.addr %s2537, 8
          %s2539 = scalar_lea.vmem [#allocation33], %s2538
          %2540 = dma.done %s2536, 128
        $region180: #{tpu_custom_call.1} parent=175 // pred_fallthru
          _
      $region176: #{tpu_custom_call.1} parent=5 // pred_fallthru
        _
    $region6: #{tpu_custom_call.1} parent=1 // loop_footer
      %s45 = sadd.s32 1, %s41
    $region7: #{tpu_custom_call.1} parent=1 // loop_footer_branch
      %40 = sbr.rel target = $region3
    $region8: #{tpu_custom_call.1} parent=1 // loop_exit
      _
    %2541 = vsyncpa [#allocation5], 1
    %s2542 = scalar_lea.sflag [#allocation5], 1
    %2543 = vsyncpa %s2542, 1
    %2544 = vsyncpa [#allocation8], 1
    %s2545 = scalar_lea.sflag [#allocation8], 1
    %2546 = vsyncpa %s2545, 1
    %2547 = vsyncpa [#allocation11], 1
    %2548 = vsyncpa [#allocation14], 1
    %2549 = vsyncpa [#allocation17], 1
    %2550 = vsyncpa [#allocation20], 1
    %2551 = vsyncpa [#allocation23], 1
    %2552 = vsyncpa [#allocation26], 1
    %2553 = vsyncpa [#allocation29], 1
    %2554 = vsyncpa [#allocation32], 1
    %2555 = vsyncpa [#allocation6], 1
    %s2556 = scalar_lea.sflag [#allocation6], 1
    %2557 = vsyncpa %s2556, 1

</llo_original>
